<compile_context>
chip_gen: v7x
topology: tpu7x:2x2x1
jax: 0.10.0
libtpu: 0.0.40
codegen_flags: <defaults>
</compile_context>

<pallas_src>
import functools

import jax
import jax.numpy as jnp
from jax import lax
from jax.experimental import pallas as pl
from jax.experimental.pallas import tpu as pltpu

VMEM_SPEC = pl.BlockSpec(memory_space=pltpu.MemorySpace.VMEM)
SMEM_SPEC = pl.BlockSpec(memory_space=pltpu.MemorySpace.SMEM)

NODES_PER_GRAPH = 4


# ------------------------------ fused kernel ---------------------------------
def _fused_kernel(x_ref, a_ref, q_ref, w1_ref, b1_ref, w2_ref, b2_ref,
                  wih_ref, whh_ref, bl_ref, wout_ref, bout_ref, o_ref,
                  *, seq_len, batch_pad, hidden, nodes_per_graph):
    T, Bp, H, K = seq_len, batch_pad, hidden, nodes_per_graph

    x_cols = x_ref[...]                      # (Gp, K)   node feats per slab
    a_cols = a_ref[...]                      # (Gp, K*K) A_hat block coeffs
    q_cols = q_ref[...]                      # (Gp, K)   (pool @ A_hat) coeffs
    w1row = w1_ref[...]                      # (1, H)    f_in == 1
    b1row = b1_ref[...]                      # (1, H)
    w2_bf = w2_ref[...].astype(jnp.bfloat16)  # (H, H)
    b2row = b2_ref[...]                      # (1, H)

    # ---- GCN1 aggregation + (f_in==1) weight, GCN2 weight (bf16 MXU), and
    #      GCN2 aggregation fused with global_mean_pool, per within-graph node
    #      slab j on the block-diagonal structure.
    gp = x_cols.shape[0]
    pooled = jnp.zeros((gp, H), jnp.float32) + b2row          # (Gp, H)
    for j in range(K):
        # m_j[g] = sum_k A_blk[g, j, k] * x[g, k]   (GCN1 neighborhood sum)
        m_j = jnp.sum(a_cols[:, j * K:(j + 1) * K] * x_cols,
                      axis=1, keepdims=True)                  # (Gp, 1)
        # H1 row of node j in every graph: X@W1 is a broadcast (f_in == 1).
        h1_j = m_j * w1row + b1row                            # (Gp, H)
        # GCN2 weight multiply on the bf16 MXU path.
        xw2_j = jnp.dot(h1_j.astype(jnp.bfloat16), w2_bf,
                        preferred_element_type=jnp.float32)   # (Gp, H)
        # fused (mean-pool @ A_hat) contraction.
        pooled = pooled + q_cols[:, j:j + 1] * xw2_j

    # ---- LSTM: input projection hoisted out of the recurrence (bf16 MXU).
    gx = jnp.dot(pooled.astype(jnp.bfloat16),
                 wih_ref[...].astype(jnp.bfloat16),
                 preferred_element_type=jnp.float32) + bl_ref[...]   # (T*Bp, 4H)

    whh_bf = whh_ref[...].astype(jnp.bfloat16)
    lane = lax.broadcasted_iota(jnp.int32, (Bp, 4 * H), 1)
    g_block = (lane >= 2 * H) & (lane < 3 * H)    # tanh block (PyTorch i,f,g,o)

    h = jnp.zeros((Bp, H), jnp.float32)
    c = jnp.zeros((Bp, H), jnp.float32)
    for t in range(T):                            # T == 5, static unroll
        gates = gx[t * Bp:(t + 1) * Bp, :] + jnp.dot(
            h.astype(jnp.bfloat16), whh_bf, preferred_element_type=jnp.float32)
        # Activate the whole lane-dense (Bp, 4H) tile; narrow split only for
        # the c/h state update.
        act = jnp.where(g_block, jnp.tanh(gates), jax.nn.sigmoid(gates))
        i_a = act[:, 0:H]
        f_a = act[:, H:2 * H]
        g_a = act[:, 2 * H:3 * H]
        o_a = act[:, 3 * H:4 * H]
        c = f_a * c + i_a * g_a
        h = o_a * jnp.tanh(c)

    # ---- output_layer(lstm_out[:, -1, :]) as VPU multiply + lane reduction.
    o_ref[...] = (jnp.sum(h * wout_ref[...], axis=1, keepdims=True)
                  + bout_ref[0, 0])


# -------------------------------- full forward -------------------------------
def spatial_temporal_gnn_forward(params, x_cols, a_cols, q_cols,
                                 batch_size=30, seq_len=5, batch_pad=32,
                                 nodes_per_graph=NODES_PER_GRAPH):
    (w1, b1), (w2, b2) = params["gcn"]
    hidden = w1.shape[1]
    kernel = functools.partial(_fused_kernel, seq_len=seq_len,
                               batch_pad=batch_pad, hidden=hidden,
                               nodes_per_graph=nodes_per_graph)
    out = pl.pallas_call(
        kernel,
        out_shape=jax.ShapeDtypeStruct((batch_pad, 1), jnp.float32),
        in_specs=[VMEM_SPEC] * 11 + [SMEM_SPEC],
        out_specs=VMEM_SPEC,
    )(x_cols, a_cols, q_cols,
      w1, b1.reshape(1, hidden), w2, b2.reshape(1, hidden),
      params["w_ih"], params["w_hh"], params["b_lstm"].reshape(1, 4 * hidden),
      params["w_out"].reshape(1, hidden),          # row form for VPU reduce
      params["b_out"].reshape(1, 1))
    return out[:batch_size]                        # drop the 2 padded rows


# -------------------- one-time host-side staging (not per call) --------------
def build_graph_constants(a_hat, batch_size, seq_len, batch_pad,
                          nodes_per_graph=NODES_PER_GRAPH):
    """Extract per-graph 4x4 A_hat blocks and the pool@A_hat fused coefficients
    in time-major, batch-padded graph order (row r = t*batch_pad + b)."""
    K = nodes_per_graph
    num_graphs = batch_size * seq_len
    gp = seq_len * batch_pad
    r = jnp.arange(gp)
    t_idx = r // batch_pad
    b_idx = r % batch_pad
    valid = b_idx < batch_size
    g_py = jnp.where(valid, b_idx * seq_len + t_idx, 0)   # PyG graph index

    blocks = a_hat.reshape(num_graphs, K, num_graphs, K)
    gi = jnp.arange(num_graphs)
    blocks = blocks[gi, :, gi, :]                          # (num_graphs, K, K)

    blk = jnp.where(valid[:, None, None], blocks[g_py], 0.0)   # (Gp, K, K)
    a_cols = blk.reshape(gp, K * K).astype(jnp.float32)
    q_cols = blk.mean(axis=1).astype(jnp.float32)   # (1/K) * sum_i A_blk[:,i,j]
    node_index = g_py[:, None] * K + jnp.arange(K)[None, :]    # (Gp, K)
    return {"a_cols": a_cols, "q_cols": q_cols,
            "node_index": node_index, "valid": valid}


def stage_node_features(x, consts):
    """Gather node features (N,1) into the kernel's (Gp, K) slab layout."""
    x_cols = x.reshape(-1)[consts["node_index"]]
    return jnp.where(consts["valid"][:, None], x_cols, 0.0).astype(jnp.float32)


# ------------------------------ pure-JAX reference ----------------------------
def reference_forward(params, x, a_hat, pool_mat, batch_size=30, seq_len=5):
    h = x
    for (w, b) in params["gcn"]:
        h = a_hat @ (h @ w) + b
    pooled = pool_mat @ h                        # batch-major (b*T + t)
    H = pooled.shape[1]
    seq = pooled.reshape(batch_size, seq_len, H)
    hs = jnp.zeros((batch_size, H), jnp.float32)
    cs = jnp.zeros((batch_size, H), jnp.float32)
    for t in range(seq_len):
        gates = seq[:, t, :] @ params["w_ih"] + hs @ params["w_hh"] + params["b_lstm"]
        i = jax.nn.sigmoid(gates[:, :H])
        f = jax.nn.sigmoid(gates[:, H:2 * H])
        g = jnp.tanh(gates[:, 2 * H:3 * H])
        o = jax.nn.sigmoid(gates[:, 3 * H:])
        cs = f * cs + i * g
        hs = o * jnp.tanh(cs)
    return hs @ params["w_out"] + params["b_out"]


if __name__ == "__main__":
    # Sizes implied by the forward: batch_size=30, seq_len=5 (hardcoded in the
    # module) => 150 graphs in the batched graph sequence.  Small hidden size.
    batch_size, seq_len, batch_pad = 30, 5, 32
    nodes_per_graph = NODES_PER_GRAPH
    num_graphs = batch_size * seq_len            # 150
    N = num_graphs * nodes_per_graph             # 600 nodes total
    node_feature_size = 1
    hidden = 32                                  # gcn_hidden_size == lstm_hidden_size

    key = jax.random.PRNGKey(0)
    keys = jax.random.split(key, 10)

    # Node features (graph_sequence.x)
    x = jax.random.normal(keys[0], (N, node_feature_size), dtype=jnp.float32)

    # edge_index: ring within each graph (symmetric edges), then GCN
    # normalization with self-loops: A_hat = D^-1/2 (A + I) D^-1/2
    src, dst = [], []
    for g in range(num_graphs):
        base = g * nodes_per_graph
        for i in range(nodes_per_graph):
            j = (i + 1) % nodes_per_graph
            src += [base + i, base + j]
            dst += [base + j, base + i]
    src = jnp.array(src, dtype=jnp.int32)
    dst = jnp.array(dst, dtype=jnp.int32)
    adj = jnp.zeros((N, N), jnp.float32).at[src, dst].set(1.0)
    adj_sl = adj + jnp.eye(N, dtype=jnp.float32)
    deg = adj_sl.sum(axis=1)
    d_inv_sqrt = 1.0 / jnp.sqrt(deg)
    a_hat = d_inv_sqrt[:, None] * adj_sl * d_inv_sqrt[None, :]

    # node -> graph assignment (graph index g = b*seq_len + t, PyTorch order)
    batch_vec = jnp.repeat(jnp.arange(num_graphs), nodes_per_graph)

    # Batch-major pooling matrix (reference path, matches x.view(30, 5, -1)).
    pool_mat = (jnp.arange(num_graphs)[:, None] == batch_vec[None, :]).astype(
        jnp.float32) / float(nodes_per_graph)

    # Deterministic synthetic parameters
    params = {
        "gcn": [
            (0.1 * jax.random.normal(keys[1], (node_feature_size, hidden), jnp.float32),
             0.1 * jax.random.normal(keys[2], (hidden,), jnp.float32)),
            (0.1 * jax.random.normal(keys[3], (hidden, hidden), jnp.float32),
             0.1 * jax.random.normal(keys[4], (hidden,), jnp.float32)),
        ],
        "w_ih": 0.1 * jax.random.normal(keys[5], (hidden, 4 * hidden), jnp.float32),
        "w_hh": 0.1 * jax.random.normal(keys[6], (hidden, 4 * hidden), jnp.float32),
        "b_lstm": 0.1 * jax.random.normal(keys[7], (4 * hidden,), jnp.float32),
        "w_out": 0.1 * jax.random.normal(keys[8], (hidden, 1), jnp.float32),
        "b_out": 0.1 * jax.random.normal(keys[9], (1,), jnp.float32),
    }

    # One-time staging of graph-structure constants + node-feature layout.
    consts = build_graph_constants(a_hat, batch_size, seq_len, batch_pad,
                                   nodes_per_graph)
    x_cols = stage_node_features(x, consts)

    pred = spatial_temporal_gnn_forward(params, x_cols,
                                        consts["a_cols"], consts["q_cols"],
                                        batch_size, seq_len, batch_pad,
                                        nodes_per_graph)
    pred = jax.block_until_ready(pred)
    assert pred.shape == (batch_size, 1)

    ref = reference_forward(params, x, a_hat, pool_mat, batch_size, seq_len)
    assert jnp.allclose(pred, ref, rtol=2e-2, atol=2e-2), (
        "Pallas output mismatch vs JAX reference")

    print("KERNEL_OK")
</pallas_src>

<mosaic_0001>
module attributes {stable_mosaic.version = 11 : i64} {
  func.func @_fused_kernel(%arg0: memref<160x4xf32, #tpu.memory_space<vmem>>, %arg1: memref<160x16xf32, #tpu.memory_space<vmem>>, %arg2: memref<160x4xf32, #tpu.memory_space<vmem>>, %arg3: memref<1x32xf32, #tpu.memory_space<vmem>>, %arg4: memref<1x32xf32, #tpu.memory_space<vmem>>, %arg5: memref<32x32xf32, #tpu.memory_space<vmem>>, %arg6: memref<1x32xf32, #tpu.memory_space<vmem>>, %arg7: memref<32x128xf32, #tpu.memory_space<vmem>>, %arg8: memref<32x128xf32, #tpu.memory_space<vmem>>, %arg9: memref<1x128xf32, #tpu.memory_space<vmem>>, %arg10: memref<1x32xf32, #tpu.memory_space<vmem>>, %arg11: memref<1x1xf32, #tpu.memory_space<smem>>, %arg12: memref<32x1xf32, #tpu.memory_space<vmem>>) attributes {dimension_semantics = [], scalar_prefetch = 0 : i64, scratch_operands = 0 : i64, tpu.core_type = #tpu.core_type<tc>} {
    %c0 = arith.constant 0 : index
    %c0_0 = arith.constant 0 : index
    %0 = vector.load %arg0[%c0, %c0_0] : memref<160x4xf32, #tpu.memory_space<vmem>>, vector<160x4xf32>
    %c0_1 = arith.constant 0 : index
    %c0_2 = arith.constant 0 : index
    %1 = vector.load %arg1[%c0_1, %c0_2] : memref<160x16xf32, #tpu.memory_space<vmem>>, vector<160x16xf32>
    %c0_3 = arith.constant 0 : index
    %c0_4 = arith.constant 0 : index
    %2 = vector.load %arg2[%c0_3, %c0_4] : memref<160x4xf32, #tpu.memory_space<vmem>>, vector<160x4xf32>
    %c0_5 = arith.constant 0 : index
    %c0_6 = arith.constant 0 : index
    %3 = vector.load %arg3[%c0_5, %c0_6] : memref<1x32xf32, #tpu.memory_space<vmem>>, vector<1x32xf32>
    %c0_7 = arith.constant 0 : index
    %c0_8 = arith.constant 0 : index
    %4 = vector.load %arg4[%c0_7, %c0_8] : memref<1x32xf32, #tpu.memory_space<vmem>>, vector<1x32xf32>
    %c0_9 = arith.constant 0 : index
    %c0_10 = arith.constant 0 : index
    %5 = vector.load %arg5[%c0_9, %c0_10] : memref<32x32xf32, #tpu.memory_space<vmem>>, vector<32x32xf32>
    %6 = arith.truncf %5 : vector<32x32xf32> to vector<32x32xbf16>
    %c0_11 = arith.constant 0 : index
    %c0_12 = arith.constant 0 : index
    %7 = vector.load %arg6[%c0_11, %c0_12] : memref<1x32xf32, #tpu.memory_space<vmem>>, vector<1x32xf32>
    %cst = arith.constant 0.000000e+00 : f32
    %8 = vector.broadcast %cst : f32 to vector<160x32xf32>
    %9 = vector.broadcast %7 : vector<1x32xf32> to vector<160x32xf32>
    %10 = arith.addf %8, %9 : vector<160x32xf32>
    %11 = vector.extract_strided_slice %1 {offsets = [0, 0], sizes = [160, 4], strides = [1, 1]} : vector<160x16xf32> to vector<160x4xf32>
    %12 = arith.mulf %11, %0 : vector<160x4xf32>
    %cst_13 = arith.constant dense<0.000000e+00> : vector<160xf32>
    %13 = vector.multi_reduction <add>, %12, %cst_13 [1] : vector<160x4xf32> to vector<160xf32>
    %14 = vector.shape_cast %13 : vector<160xf32> to vector<160x1xf32>
    %15 = vector.broadcast %14 : vector<160x1xf32> to vector<160x32xf32>
    %16 = vector.broadcast %3 : vector<1x32xf32> to vector<160x32xf32>
    %17 = arith.mulf %15, %16 : vector<160x32xf32>
    %18 = vector.broadcast %4 : vector<1x32xf32> to vector<160x32xf32>
    %19 = arith.addf %17, %18 : vector<160x32xf32>
    %20 = arith.truncf %19 : vector<160x32xf32> to vector<160x32xbf16>
    %cst_14 = arith.constant dense<0.000000e+00> : vector<160x32xf32>
    %21 = tpu.matmul %20, %6, %cst_14 {dimension_numbers = #tpu.dot_dimension_numbers<[1], [0], [0], [1], [0, 0, 1, 1], [], []>} : vector<160x32xbf16>, vector<32x32xbf16>, vector<160x32xf32> -> vector<160x32xf32>
    %22 = vector.extract_strided_slice %2 {offsets = [0, 0], sizes = [160, 1], strides = [1, 1]} : vector<160x4xf32> to vector<160x1xf32>
    %23 = vector.broadcast %22 : vector<160x1xf32> to vector<160x32xf32>
    %24 = arith.mulf %23, %21 : vector<160x32xf32>
    %25 = arith.addf %10, %24 : vector<160x32xf32>
    %26 = vector.extract_strided_slice %1 {offsets = [0, 4], sizes = [160, 4], strides = [1, 1]} : vector<160x16xf32> to vector<160x4xf32>
    %27 = arith.mulf %26, %0 : vector<160x4xf32>
    %cst_15 = arith.constant dense<0.000000e+00> : vector<160xf32>
    %28 = vector.multi_reduction <add>, %27, %cst_15 [1] : vector<160x4xf32> to vector<160xf32>
    %29 = vector.shape_cast %28 : vector<160xf32> to vector<160x1xf32>
    %30 = vector.broadcast %29 : vector<160x1xf32> to vector<160x32xf32>
    %31 = vector.broadcast %3 : vector<1x32xf32> to vector<160x32xf32>
    %32 = arith.mulf %30, %31 : vector<160x32xf32>
    %33 = vector.broadcast %4 : vector<1x32xf32> to vector<160x32xf32>
    %34 = arith.addf %32, %33 : vector<160x32xf32>
    %35 = arith.truncf %34 : vector<160x32xf32> to vector<160x32xbf16>
    %cst_16 = arith.constant dense<0.000000e+00> : vector<160x32xf32>
    %36 = tpu.matmul %35, %6, %cst_16 {dimension_numbers = #tpu.dot_dimension_numbers<[1], [0], [0], [1], [0, 0, 1, 1], [], []>} : vector<160x32xbf16>, vector<32x32xbf16>, vector<160x32xf32> -> vector<160x32xf32>
    %37 = vector.extract_strided_slice %2 {offsets = [0, 1], sizes = [160, 1], strides = [1, 1]} : vector<160x4xf32> to vector<160x1xf32>
    %38 = vector.broadcast %37 : vector<160x1xf32> to vector<160x32xf32>
    %39 = arith.mulf %38, %36 : vector<160x32xf32>
    %40 = arith.addf %25, %39 : vector<160x32xf32>
    %41 = vector.extract_strided_slice %1 {offsets = [0, 8], sizes = [160, 4], strides = [1, 1]} : vector<160x16xf32> to vector<160x4xf32>
    %42 = arith.mulf %41, %0 : vector<160x4xf32>
    %cst_17 = arith.constant dense<0.000000e+00> : vector<160xf32>
    %43 = vector.multi_reduction <add>, %42, %cst_17 [1] : vector<160x4xf32> to vector<160xf32>
    %44 = vector.shape_cast %43 : vector<160xf32> to vector<160x1xf32>
    %45 = vector.broadcast %44 : vector<160x1xf32> to vector<160x32xf32>
    %46 = vector.broadcast %3 : vector<1x32xf32> to vector<160x32xf32>
    %47 = arith.mulf %45, %46 : vector<160x32xf32>
    %48 = vector.broadcast %4 : vector<1x32xf32> to vector<160x32xf32>
    %49 = arith.addf %47, %48 : vector<160x32xf32>
    %50 = arith.truncf %49 : vector<160x32xf32> to vector<160x32xbf16>
    %cst_18 = arith.constant dense<0.000000e+00> : vector<160x32xf32>
    %51 = tpu.matmul %50, %6, %cst_18 {dimension_numbers = #tpu.dot_dimension_numbers<[1], [0], [0], [1], [0, 0, 1, 1], [], []>} : vector<160x32xbf16>, vector<32x32xbf16>, vector<160x32xf32> -> vector<160x32xf32>
    %52 = vector.extract_strided_slice %2 {offsets = [0, 2], sizes = [160, 1], strides = [1, 1]} : vector<160x4xf32> to vector<160x1xf32>
    %53 = vector.broadcast %52 : vector<160x1xf32> to vector<160x32xf32>
    %54 = arith.mulf %53, %51 : vector<160x32xf32>
    %55 = arith.addf %40, %54 : vector<160x32xf32>
    %56 = vector.extract_strided_slice %1 {offsets = [0, 12], sizes = [160, 4], strides = [1, 1]} : vector<160x16xf32> to vector<160x4xf32>
    %57 = arith.mulf %56, %0 : vector<160x4xf32>
    %cst_19 = arith.constant dense<0.000000e+00> : vector<160xf32>
    %58 = vector.multi_reduction <add>, %57, %cst_19 [1] : vector<160x4xf32> to vector<160xf32>
    %59 = vector.shape_cast %58 : vector<160xf32> to vector<160x1xf32>
    %60 = vector.broadcast %59 : vector<160x1xf32> to vector<160x32xf32>
    %61 = vector.broadcast %3 : vector<1x32xf32> to vector<160x32xf32>
    %62 = arith.mulf %60, %61 : vector<160x32xf32>
    %63 = vector.broadcast %4 : vector<1x32xf32> to vector<160x32xf32>
    %64 = arith.addf %62, %63 : vector<160x32xf32>
    %65 = arith.truncf %64 : vector<160x32xf32> to vector<160x32xbf16>
    %cst_20 = arith.constant dense<0.000000e+00> : vector<160x32xf32>
    %66 = tpu.matmul %65, %6, %cst_20 {dimension_numbers = #tpu.dot_dimension_numbers<[1], [0], [0], [1], [0, 0, 1, 1], [], []>} : vector<160x32xbf16>, vector<32x32xbf16>, vector<160x32xf32> -> vector<160x32xf32>
    %67 = vector.extract_strided_slice %2 {offsets = [0, 3], sizes = [160, 1], strides = [1, 1]} : vector<160x4xf32> to vector<160x1xf32>
    %68 = vector.broadcast %67 : vector<160x1xf32> to vector<160x32xf32>
    %69 = arith.mulf %68, %66 : vector<160x32xf32>
    %70 = arith.addf %55, %69 : vector<160x32xf32>
    %71 = arith.truncf %70 : vector<160x32xf32> to vector<160x32xbf16>
    %c0_21 = arith.constant 0 : index
    %c0_22 = arith.constant 0 : index
    %72 = vector.load %arg7[%c0_21, %c0_22] : memref<32x128xf32, #tpu.memory_space<vmem>>, vector<32x128xf32>
    %73 = arith.truncf %72 : vector<32x128xf32> to vector<32x128xbf16>
    %cst_23 = arith.constant dense<0.000000e+00> : vector<160x128xf32>
    %74 = tpu.matmul %71, %73, %cst_23 {dimension_numbers = #tpu.dot_dimension_numbers<[1], [0], [0], [1], [0, 0, 1, 1], [], []>} : vector<160x32xbf16>, vector<32x128xbf16>, vector<160x128xf32> -> vector<160x128xf32>
    %c0_24 = arith.constant 0 : index
    %c0_25 = arith.constant 0 : index
    %75 = vector.load %arg9[%c0_24, %c0_25] : memref<1x128xf32, #tpu.memory_space<vmem>>, vector<1x128xf32>
    %76 = vector.broadcast %75 : vector<1x128xf32> to vector<160x128xf32>
    %77 = arith.addf %74, %76 : vector<160x128xf32>
    %c0_26 = arith.constant 0 : index
    %c0_27 = arith.constant 0 : index
    %78 = vector.load %arg8[%c0_26, %c0_27] : memref<32x128xf32, #tpu.memory_space<vmem>>, vector<32x128xf32>
    %79 = arith.truncf %78 : vector<32x128xf32> to vector<32x128xbf16>
    %80 = tpu.iota {dimensions = array<i32: 1>} : vector<32x128xi32>
    %c64_i32 = arith.constant 64 : i32
    %81 = vector.broadcast %c64_i32 : i32 to vector<32x128xi32>
    %82 = arith.cmpi sge, %80, %81 : vector<32x128xi32>
    %c96_i32 = arith.constant 96 : i32
    %83 = vector.broadcast %c96_i32 : i32 to vector<32x128xi32>
    %84 = arith.cmpi slt, %80, %83 : vector<32x128xi32>
    %85 = arith.andi %82, %84 : vector<32x128xi1>
    %cst_28 = arith.constant 0.000000e+00 : f32
    %86 = vector.broadcast %cst_28 : f32 to vector<32x32xf32>
    %cst_29 = arith.constant 0.000000e+00 : f32
    %87 = vector.broadcast %cst_29 : f32 to vector<32x32xf32>
    %88 = vector.extract_strided_slice %77 {offsets = [0, 0], sizes = [32, 128], strides = [1, 1]} : vector<160x128xf32> to vector<32x128xf32>
    %89 = arith.truncf %86 : vector<32x32xf32> to vector<32x32xbf16>
    %cst_30 = arith.constant dense<0.000000e+00> : vector<32x128xf32>
    %90 = tpu.matmul %89, %79, %cst_30 {dimension_numbers = #tpu.dot_dimension_numbers<[1], [0], [0], [1], [0, 0, 1, 1], [], []>} : vector<32x32xbf16>, vector<32x128xbf16>, vector<32x128xf32> -> vector<32x128xf32>
    %91 = arith.addf %88, %90 : vector<32x128xf32>
    %92 = math.tanh %91 : vector<32x128xf32>
    %93 = arith.negf %91 : vector<32x128xf32>
    %94 = math.exp %93 : vector<32x128xf32>
    %cst_31 = arith.constant 1.000000e+00 : f32
    %95 = vector.broadcast %cst_31 : f32 to vector<32x128xf32>
    %96 = arith.addf %95, %94 : vector<32x128xf32>
    %97 = arith.divf %95, %96 : vector<32x128xf32>
    %98 = arith.select %85, %92, %97 : vector<32x128xi1>, vector<32x128xf32>
    %99 = vector.extract_strided_slice %98 {offsets = [0, 0], sizes = [32, 32], strides = [1, 1]} : vector<32x128xf32> to vector<32x32xf32>
    %100 = vector.extract_strided_slice %98 {offsets = [0, 32], sizes = [32, 32], strides = [1, 1]} : vector<32x128xf32> to vector<32x32xf32>
    %101 = vector.extract_strided_slice %98 {offsets = [0, 64], sizes = [32, 32], strides = [1, 1]} : vector<32x128xf32> to vector<32x32xf32>
    %102 = vector.extract_strided_slice %98 {offsets = [0, 96], sizes = [32, 32], strides = [1, 1]} : vector<32x128xf32> to vector<32x32xf32>
    %103 = arith.mulf %100, %87 : vector<32x32xf32>
    %104 = arith.mulf %99, %101 : vector<32x32xf32>
    %105 = arith.addf %103, %104 : vector<32x32xf32>
    %106 = math.tanh %105 : vector<32x32xf32>
    %107 = arith.mulf %102, %106 : vector<32x32xf32>
    %108 = vector.extract_strided_slice %77 {offsets = [32, 0], sizes = [32, 128], strides = [1, 1]} : vector<160x128xf32> to vector<32x128xf32>
    %109 = arith.truncf %107 : vector<32x32xf32> to vector<32x32xbf16>
    %cst_32 = arith.constant dense<0.000000e+00> : vector<32x128xf32>
    %110 = tpu.matmul %109, %79, %cst_32 {dimension_numbers = #tpu.dot_dimension_numbers<[1], [0], [0], [1], [0, 0, 1, 1], [], []>} : vector<32x32xbf16>, vector<32x128xbf16>, vector<32x128xf32> -> vector<32x128xf32>
    %111 = arith.addf %108, %110 : vector<32x128xf32>
    %112 = math.tanh %111 : vector<32x128xf32>
    %113 = arith.negf %111 : vector<32x128xf32>
    %114 = math.exp %113 : vector<32x128xf32>
    %cst_33 = arith.constant 1.000000e+00 : f32
    %115 = vector.broadcast %cst_33 : f32 to vector<32x128xf32>
    %116 = arith.addf %115, %114 : vector<32x128xf32>
    %117 = arith.divf %115, %116 : vector<32x128xf32>
    %118 = arith.select %85, %112, %117 : vector<32x128xi1>, vector<32x128xf32>
    %119 = vector.extract_strided_slice %118 {offsets = [0, 0], sizes = [32, 32], strides = [1, 1]} : vector<32x128xf32> to vector<32x32xf32>
    %120 = vector.extract_strided_slice %118 {offsets = [0, 32], sizes = [32, 32], strides = [1, 1]} : vector<32x128xf32> to vector<32x32xf32>
    %121 = vector.extract_strided_slice %118 {offsets = [0, 64], sizes = [32, 32], strides = [1, 1]} : vector<32x128xf32> to vector<32x32xf32>
    %122 = vector.extract_strided_slice %118 {offsets = [0, 96], sizes = [32, 32], strides = [1, 1]} : vector<32x128xf32> to vector<32x32xf32>
    %123 = arith.mulf %120, %105 : vector<32x32xf32>
    %124 = arith.mulf %119, %121 : vector<32x32xf32>
    %125 = arith.addf %123, %124 : vector<32x32xf32>
    %126 = math.tanh %125 : vector<32x32xf32>
    %127 = arith.mulf %122, %126 : vector<32x32xf32>
    %128 = vector.extract_strided_slice %77 {offsets = [64, 0], sizes = [32, 128], strides = [1, 1]} : vector<160x128xf32> to vector<32x128xf32>
    %129 = arith.truncf %127 : vector<32x32xf32> to vector<32x32xbf16>
    %cst_34 = arith.constant dense<0.000000e+00> : vector<32x128xf32>
    %130 = tpu.matmul %129, %79, %cst_34 {dimension_numbers = #tpu.dot_dimension_numbers<[1], [0], [0], [1], [0, 0, 1, 1], [], []>} : vector<32x32xbf16>, vector<32x128xbf16>, vector<32x128xf32> -> vector<32x128xf32>
    %131 = arith.addf %128, %130 : vector<32x128xf32>
    %132 = math.tanh %131 : vector<32x128xf32>
    %133 = arith.negf %131 : vector<32x128xf32>
    %134 = math.exp %133 : vector<32x128xf32>
    %cst_35 = arith.constant 1.000000e+00 : f32
    %135 = vector.broadcast %cst_35 : f32 to vector<32x128xf32>
    %136 = arith.addf %135, %134 : vector<32x128xf32>
    %137 = arith.divf %135, %136 : vector<32x128xf32>
    %138 = arith.select %85, %132, %137 : vector<32x128xi1>, vector<32x128xf32>
    %139 = vector.extract_strided_slice %138 {offsets = [0, 0], sizes = [32, 32], strides = [1, 1]} : vector<32x128xf32> to vector<32x32xf32>
    %140 = vector.extract_strided_slice %138 {offsets = [0, 32], sizes = [32, 32], strides = [1, 1]} : vector<32x128xf32> to vector<32x32xf32>
    %141 = vector.extract_strided_slice %138 {offsets = [0, 64], sizes = [32, 32], strides = [1, 1]} : vector<32x128xf32> to vector<32x32xf32>
    %142 = vector.extract_strided_slice %138 {offsets = [0, 96], sizes = [32, 32], strides = [1, 1]} : vector<32x128xf32> to vector<32x32xf32>
    %143 = arith.mulf %140, %125 : vector<32x32xf32>
    %144 = arith.mulf %139, %141 : vector<32x32xf32>
    %145 = arith.addf %143, %144 : vector<32x32xf32>
    %146 = math.tanh %145 : vector<32x32xf32>
    %147 = arith.mulf %142, %146 : vector<32x32xf32>
    %148 = vector.extract_strided_slice %77 {offsets = [96, 0], sizes = [32, 128], strides = [1, 1]} : vector<160x128xf32> to vector<32x128xf32>
    %149 = arith.truncf %147 : vector<32x32xf32> to vector<32x32xbf16>
    %cst_36 = arith.constant dense<0.000000e+00> : vector<32x128xf32>
    %150 = tpu.matmul %149, %79, %cst_36 {dimension_numbers = #tpu.dot_dimension_numbers<[1], [0], [0], [1], [0, 0, 1, 1], [], []>} : vector<32x32xbf16>, vector<32x128xbf16>, vector<32x128xf32> -> vector<32x128xf32>
    %151 = arith.addf %148, %150 : vector<32x128xf32>
    %152 = math.tanh %151 : vector<32x128xf32>
    %153 = arith.negf %151 : vector<32x128xf32>
    %154 = math.exp %153 : vector<32x128xf32>
    %cst_37 = arith.constant 1.000000e+00 : f32
    %155 = vector.broadcast %cst_37 : f32 to vector<32x128xf32>
    %156 = arith.addf %155, %154 : vector<32x128xf32>
    %157 = arith.divf %155, %156 : vector<32x128xf32>
    %158 = arith.select %85, %152, %157 : vector<32x128xi1>, vector<32x128xf32>
    %159 = vector.extract_strided_slice %158 {offsets = [0, 0], sizes = [32, 32], strides = [1, 1]} : vector<32x128xf32> to vector<32x32xf32>
    %160 = vector.extract_strided_slice %158 {offsets = [0, 32], sizes = [32, 32], strides = [1, 1]} : vector<32x128xf32> to vector<32x32xf32>
    %161 = vector.extract_strided_slice %158 {offsets = [0, 64], sizes = [32, 32], strides = [1, 1]} : vector<32x128xf32> to vector<32x32xf32>
    %162 = vector.extract_strided_slice %158 {offsets = [0, 96], sizes = [32, 32], strides = [1, 1]} : vector<32x128xf32> to vector<32x32xf32>
    %163 = arith.mulf %160, %145 : vector<32x32xf32>
    %164 = arith.mulf %159, %161 : vector<32x32xf32>
    %165 = arith.addf %163, %164 : vector<32x32xf32>
    %166 = math.tanh %165 : vector<32x32xf32>
    %167 = arith.mulf %162, %166 : vector<32x32xf32>
    %168 = vector.extract_strided_slice %77 {offsets = [128, 0], sizes = [32, 128], strides = [1, 1]} : vector<160x128xf32> to vector<32x128xf32>
    %169 = arith.truncf %167 : vector<32x32xf32> to vector<32x32xbf16>
    %cst_38 = arith.constant dense<0.000000e+00> : vector<32x128xf32>
    %170 = tpu.matmul %169, %79, %cst_38 {dimension_numbers = #tpu.dot_dimension_numbers<[1], [0], [0], [1], [0, 0, 1, 1], [], []>} : vector<32x32xbf16>, vector<32x128xbf16>, vector<32x128xf32> -> vector<32x128xf32>
    %171 = arith.addf %168, %170 : vector<32x128xf32>
    %172 = math.tanh %171 : vector<32x128xf32>
    %173 = arith.negf %171 : vector<32x128xf32>
    %174 = math.exp %173 : vector<32x128xf32>
    %cst_39 = arith.constant 1.000000e+00 : f32
    %175 = vector.broadcast %cst_39 : f32 to vector<32x128xf32>
    %176 = arith.addf %175, %174 : vector<32x128xf32>
    %177 = arith.divf %175, %176 : vector<32x128xf32>
    %178 = arith.select %85, %172, %177 : vector<32x128xi1>, vector<32x128xf32>
    %179 = vector.extract_strided_slice %178 {offsets = [0, 0], sizes = [32, 32], strides = [1, 1]} : vector<32x128xf32> to vector<32x32xf32>
    %180 = vector.extract_strided_slice %178 {offsets = [0, 32], sizes = [32, 32], strides = [1, 1]} : vector<32x128xf32> to vector<32x32xf32>
    %181 = vector.extract_strided_slice %178 {offsets = [0, 64], sizes = [32, 32], strides = [1, 1]} : vector<32x128xf32> to vector<32x32xf32>
    %182 = vector.extract_strided_slice %178 {offsets = [0, 96], sizes = [32, 32], strides = [1, 1]} : vector<32x128xf32> to vector<32x32xf32>
    %183 = arith.mulf %180, %165 : vector<32x32xf32>
    %184 = arith.mulf %179, %181 : vector<32x32xf32>
    %185 = arith.addf %183, %184 : vector<32x32xf32>
    %186 = math.tanh %185 : vector<32x32xf32>
    %187 = arith.mulf %182, %186 : vector<32x32xf32>
    %c0_40 = arith.constant 0 : index
    %c0_41 = arith.constant 0 : index
    %188 = vector.load %arg10[%c0_40, %c0_41] : memref<1x32xf32, #tpu.memory_space<vmem>>, vector<1x32xf32>
    %189 = vector.broadcast %188 : vector<1x32xf32> to vector<32x32xf32>
    %190 = arith.mulf %187, %189 : vector<32x32xf32>
    %cst_42 = arith.constant dense<0.000000e+00> : vector<32xf32>
    %191 = vector.multi_reduction <add>, %190, %cst_42 [1] : vector<32x32xf32> to vector<32xf32>
    %192 = vector.shape_cast %191 : vector<32xf32> to vector<32x1xf32>
    %c0_43 = arith.constant 0 : index
    %c0_44 = arith.constant 0 : index
    %193 = memref.load %arg11[%c0_43, %c0_44] : memref<1x1xf32, #tpu.memory_space<smem>>
    %194 = vector.broadcast %193 : f32 to vector<32x1xf32>
    %195 = arith.addf %192, %194 : vector<32x1xf32>
    %c0_45 = arith.constant 0 : index
    %c0_46 = arith.constant 0 : index
    %196 = vector.load %arg12[%c0_45, %c0_46] : memref<32x1xf32, #tpu.memory_space<vmem>>, vector<32x1xf32>
    tpu.vector_store %arg12[%c0_45, %c0_46], %195 {strides = array<i32>} : memref<32x1xf32, #tpu.memory_space<vmem>>, vector<32x1xf32>,
    return
  }
}

</mosaic_0001>

<llo_original>
// kernel: tpu_custom_call.1
$region0: #{tpu_custom_call.1}
  #allocation0 [shape = 'u32[]', space=smem, size = 0x4, offset = 0x4, fixed_abs, tag = 'smem constant byte address 0x4 - core index']
  #allocation1 [shape = 'u32[144,128]{1,0:T(1,128)}', space=vmem, size = 0x12000, scoped, tag = 'internal scratch']
  #allocation2 [shape = 'f32[1,1]{1,0:T(1,128)S(6)}', space=smem, size = 0x200, scoped, tag = 'scoped memory for tpu_custom_call.1']
  %s0 = inlined_call_operand.vmem [shape: f32[160,4], index: 0, kind: input, shape index: {}]
  %s1 = inlined_call_operand.vmem [shape: f32[160,16], index: 1, kind: input, shape index: {}]
  %s2 = inlined_call_operand.vmem [shape: f32[160,4], index: 2, kind: input, shape index: {}]
  %s3 = inlined_call_operand.vmem [shape: f32[1,32], index: 3, kind: input, shape index: {}]
  %s4 = inlined_call_operand.vmem [shape: f32[1,32], index: 4, kind: input, shape index: {}]
  %s5 = inlined_call_operand.vmem [shape: f32[32,32], index: 5, kind: input, shape index: {}]
  %s6 = inlined_call_operand.vmem [shape: f32[1,32], index: 6, kind: input, shape index: {}]
  %s7 = inlined_call_operand.vmem [shape: f32[32,128], index: 7, kind: input, shape index: {}]
  %s8 = inlined_call_operand.vmem [shape: f32[32,128], index: 8, kind: input, shape index: {}]
  %s9 = inlined_call_operand.vmem [shape: f32[1,128], index: 9, kind: input, shape index: {}]
  %s10 = inlined_call_operand.vmem [shape: f32[1,32], index: 10, kind: input, shape index: {}]
  %s11 = inlined_call_operand.<no memory space> [shape: f32[1,1], index: 11, kind: input, shape index: {}]
  %s12 = inlined_call_operand.vmem [shape: f32[32,1], index: 12, kind: output, shape index: {}]
  %s13 = sld [smem:[#allocation0]]
  $region58: #{tpu_custom_call.1} parent=0
    _
  %s15 = ssub.s32 1, %s13
  %s16 = scalar_select 0, %s15, %s13
  %17 = sst [smem:[#allocation2]] %s11
  // Predicated region
  $region2: #{tpu_custom_call.1} parent=0 // pred_check
    _
  $region3: #{tpu_custom_call.1} parent=0 // pred_check_branch
    %19 = sbr.rel (0) target = $region5
  $region4: #{tpu_custom_call.1} parent=0 // pred_region
    _
  $region5: #{tpu_custom_call.1} parent=0 // pred_fallthru
    _
  // Predicated region
  $region6: #{tpu_custom_call.1} parent=0 // pred_check
    _
  $region7: #{tpu_custom_call.1} parent=0 // pred_check_branch
    %21 = sbr.rel (0) target = $region9
  $region8: #{tpu_custom_call.1} parent=0 // pred_region
    _
  $region9: #{tpu_custom_call.1} parent=0 // pred_fallthru
    _
  // Predicated region
  $region10: #{tpu_custom_call.1} parent=0 // pred_check
    _
  $region11: #{tpu_custom_call.1} parent=0 // pred_check_branch
    %23 = sbr.rel (0) target = $region13
  $region12: #{tpu_custom_call.1} parent=0 // pred_region
    _
  $region13: #{tpu_custom_call.1} parent=0 // pred_fallthru
    _
  // Predicated region
  $region14: #{tpu_custom_call.1} parent=0 // pred_check
    _
  $region15: #{tpu_custom_call.1} parent=0 // pred_check_branch
    %25 = sbr.rel (0) target = $region17
  $region16: #{tpu_custom_call.1} parent=0 // pred_region
    _
  $region17: #{tpu_custom_call.1} parent=0 // pred_fallthru
    _
  // Predicated region
  $region18: #{tpu_custom_call.1} parent=0 // pred_check
    _
  $region19: #{tpu_custom_call.1} parent=0 // pred_check_branch
    %27 = sbr.rel (0) target = $region21
  $region20: #{tpu_custom_call.1} parent=0 // pred_region
    _
  $region21: #{tpu_custom_call.1} parent=0 // pred_fallthru
    _
  // Predicated region
  $region22: #{tpu_custom_call.1} parent=0 // pred_check
    _
  $region23: #{tpu_custom_call.1} parent=0 // pred_check_branch
    %29 = sbr.rel (0) target = $region25
  $region24: #{tpu_custom_call.1} parent=0 // pred_region
    _
  $region25: #{tpu_custom_call.1} parent=0 // pred_fallthru
    _
  // Predicated region
  $region26: #{tpu_custom_call.1} parent=0 // pred_check
    _
  $region27: #{tpu_custom_call.1} parent=0 // pred_check_branch
    %31 = sbr.rel (0) target = $region29
  $region28: #{tpu_custom_call.1} parent=0 // pred_region
    _
  $region29: #{tpu_custom_call.1} parent=0 // pred_fallthru
    _
  // Predicated region
  $region30: #{tpu_custom_call.1} parent=0 // pred_check
    _
  $region31: #{tpu_custom_call.1} parent=0 // pred_check_branch
    %33 = sbr.rel (0) target = $region33
  $region32: #{tpu_custom_call.1} parent=0 // pred_region
    _
  $region33: #{tpu_custom_call.1} parent=0 // pred_fallthru
    _
  // Predicated region
  $region34: #{tpu_custom_call.1} parent=0 // pred_check
    _
  $region35: #{tpu_custom_call.1} parent=0 // pred_check_branch
    %35 = sbr.rel (0) target = $region37
  $region36: #{tpu_custom_call.1} parent=0 // pred_region
    _
  $region37: #{tpu_custom_call.1} parent=0 // pred_fallthru
    _
  // Predicated region
  $region38: #{tpu_custom_call.1} parent=0 // pred_check
    _
  $region39: #{tpu_custom_call.1} parent=0 // pred_check_branch
    %37 = sbr.rel (0) target = $region41
  $region40: #{tpu_custom_call.1} parent=0 // pred_region
    _
  $region41: #{tpu_custom_call.1} parent=0 // pred_fallthru
    _
  // Predicated region
  $region42: #{tpu_custom_call.1} parent=0 // pred_check
    _
  $region43: #{tpu_custom_call.1} parent=0 // pred_check_branch
    %39 = sbr.rel (0) target = $region45
  $region44: #{tpu_custom_call.1} parent=0 // pred_region
    _
  $region45: #{tpu_custom_call.1} parent=0 // pred_fallthru
    _
  // Predicated region
  $region46: #{tpu_custom_call.1} parent=0 // pred_check
    _
  $region47: #{tpu_custom_call.1} parent=0 // pred_check_branch
    %41 = sbr.rel (0) target = $region49
  $region48: #{tpu_custom_call.1} parent=0 // pred_region
    _
  $region49: #{tpu_custom_call.1} parent=0 // pred_fallthru
    _
  %v43 = vld [vmem:[%s0] sm:$0xff]
  %v44 = vld [vmem:[%s0 + $0x8] sm:$0xff]
  %v45 = vld [vmem:[%s0 + $0x10] sm:$0xff]
  %v46 = vld [vmem:[%s0 + $0x18] sm:$0xff]
  %v47 = vld [vmem:[%s0 + $0x20] sm:$0xff]
  %v48 = vld [vmem:[%s0 + $0x28] sm:$0xff]
  %v49 = vld [vmem:[%s0 + $0x30] sm:$0xff]
  %v50 = vld [vmem:[%s0 + $0x38] sm:$0xff]
  %v51 = vld [vmem:[%s0 + $0x40] sm:$0xff]
  %v52 = vld [vmem:[%s0 + $0x48] sm:$0xff]
  %v53 = vld [vmem:[%s0 + $0x50] sm:$0xff]
  %v54 = vld [vmem:[%s0 + $0x58] sm:$0xff]
  %v55 = vld [vmem:[%s0 + $0x60] sm:$0xff]
  %v56 = vld [vmem:[%s0 + $0x68] sm:$0xff]
  %v57 = vld [vmem:[%s0 + $0x70] sm:$0xff]
  %v58 = vld [vmem:[%s0 + $0x78] sm:$0xff]
  %v59 = vld [vmem:[%s0 + $0x80] sm:$0xff]
  %v60 = vld [vmem:[%s0 + $0x88] sm:$0xff]
  %v61 = vld [vmem:[%s0 + $0x90] sm:$0xff]
  %v62 = vld [vmem:[%s0 + $0x98] sm:$0xff]
  %v63 = vld [vmem:[%s1] sm:$0xff]
  %v64 = vld [vmem:[%s1 + $0x8] sm:$0xff]
  %v65 = vld [vmem:[%s1 + $0x10] sm:$0xff]
  %v66 = vld [vmem:[%s1 + $0x18] sm:$0xff]
  %v67 = vld [vmem:[%s1 + $0x20] sm:$0xff]
  %v68 = vld [vmem:[%s1 + $0x28] sm:$0xff]
  %v69 = vld [vmem:[%s1 + $0x30] sm:$0xff]
  %v70 = vld [vmem:[%s1 + $0x38] sm:$0xff]
  %v71 = vld [vmem:[%s1 + $0x40] sm:$0xff]
  %v72 = vld [vmem:[%s1 + $0x48] sm:$0xff]
  %v73 = vld [vmem:[%s1 + $0x50] sm:$0xff]
  %v74 = vld [vmem:[%s1 + $0x58] sm:$0xff]
  %v75 = vld [vmem:[%s1 + $0x60] sm:$0xff]
  %v76 = vld [vmem:[%s1 + $0x68] sm:$0xff]
  %v77 = vld [vmem:[%s1 + $0x70] sm:$0xff]
  %v78 = vld [vmem:[%s1 + $0x78] sm:$0xff]
  %v79 = vld [vmem:[%s1 + $0x80] sm:$0xff]
  %v80 = vld [vmem:[%s1 + $0x88] sm:$0xff]
  %v81 = vld [vmem:[%s1 + $0x90] sm:$0xff]
  %v82 = vld [vmem:[%s1 + $0x98] sm:$0xff]
  %v83 = vld [vmem:[%s2] sm:$0xff]
  %v84 = vld [vmem:[%s2 + $0x8] sm:$0xff]
  %v85 = vld [vmem:[%s2 + $0x10] sm:$0xff]
  %v86 = vld [vmem:[%s2 + $0x18] sm:$0xff]
  %v87 = vld [vmem:[%s2 + $0x20] sm:$0xff]
  %v88 = vld [vmem:[%s2 + $0x28] sm:$0xff]
  %v89 = vld [vmem:[%s2 + $0x30] sm:$0xff]
  %v90 = vld [vmem:[%s2 + $0x38] sm:$0xff]
  %v91 = vld [vmem:[%s2 + $0x40] sm:$0xff]
  %v92 = vld [vmem:[%s2 + $0x48] sm:$0xff]
  %v93 = vld [vmem:[%s2 + $0x50] sm:$0xff]
  %v94 = vld [vmem:[%s2 + $0x58] sm:$0xff]
  %v95 = vld [vmem:[%s2 + $0x60] sm:$0xff]
  %v96 = vld [vmem:[%s2 + $0x68] sm:$0xff]
  %v97 = vld [vmem:[%s2 + $0x70] sm:$0xff]
  %v98 = vld [vmem:[%s2 + $0x78] sm:$0xff]
  %v99 = vld [vmem:[%s2 + $0x80] sm:$0xff]
  %v100 = vld [vmem:[%s2 + $0x88] sm:$0xff]
  %v101 = vld [vmem:[%s2 + $0x90] sm:$0xff]
  %v102 = vld [vmem:[%s2 + $0x98] sm:$0xff]
  %v103 = vld [vmem:[%s3] sm:$0x1]
  %v104 = vld [vmem:[%s4] sm:$0x1]
  %v105 = vld [vmem:[%s5] sm:$0xff]
  %v106 = vld [vmem:[%s5 + $0x8] sm:$0xff]
  %v107 = vld [vmem:[%s5 + $0x10] sm:$0xff]
  %v108 = vld [vmem:[%s5 + $0x18] sm:$0xff]
  %v109 = vpack.c.bf16 %v106, %v105
  %v110 = vpack.c.bf16 %v108, %v107
  %v111 = vld [vmem:[%s6] sm:$0x1]
  %v113 = vlaneseq
  %v114 = vshrl.u32 %v113, 7
  %v115 = vsub.s32 0, %v114
  %v116 = vrot.slane %v111, %v115
  %v118 = vadd.f32 %v116, 0.0
  %v119 = vmul.f32 %v63, %v43
  %v120 = vmul.f32 %v64, %v44
  %v121 = vmul.f32 %v65, %v45
  %v122 = vmul.f32 %v66, %v46
  %v123 = vmul.f32 %v67, %v47
  %v124 = vmul.f32 %v68, %v48
  %v125 = vmul.f32 %v69, %v49
  %v126 = vmul.f32 %v70, %v50
  %v127 = vmul.f32 %v71, %v51
  %v128 = vmul.f32 %v72, %v52
  %v129 = vmul.f32 %v73, %v53
  %v130 = vmul.f32 %v74, %v54
  %v131 = vmul.f32 %v75, %v55
  %v132 = vmul.f32 %v76, %v56
  %v133 = vmul.f32 %v77, %v57
  %v134 = vmul.f32 %v78, %v58
  %v135 = vmul.f32 %v79, %v59
  %v136 = vmul.f32 %v80, %v60
  %v137 = vmul.f32 %v81, %v61
  %v138 = vmul.f32 %v82, %v62
  %vm139 = vcmask 31744
  %v140 = vsel %vm139, %v119, 0.0
  %141 = vadd.xlane.f32.xlu0 %v140
  %v142 = vpop.xlane.xlu0 %141
  %v143 = vsel %vm139, %v120, 0.0
  %144 = vadd.xlane.f32.xlu0 %v143
  %v145 = vpop.xlane.xlu0 %144
  %v146 = vsel %vm139, %v121, 0.0
  %147 = vadd.xlane.f32.xlu0 %v146
  %v148 = vpop.xlane.xlu0 %147
  %v149 = vsel %vm139, %v122, 0.0
  %150 = vadd.xlane.f32.xlu0 %v149
  %v151 = vpop.xlane.xlu0 %150
  %v152 = vsel %vm139, %v123, 0.0
  %153 = vadd.xlane.f32.xlu0 %v152
  %v154 = vpop.xlane.xlu0 %153
  %v155 = vsel %vm139, %v124, 0.0
  %156 = vadd.xlane.f32.xlu0 %v155
  %v157 = vpop.xlane.xlu0 %156
  %v158 = vsel %vm139, %v125, 0.0
  %159 = vadd.xlane.f32.xlu0 %v158
  %v160 = vpop.xlane.xlu0 %159
  %v161 = vsel %vm139, %v126, 0.0
  %162 = vadd.xlane.f32.xlu0 %v161
  %v163 = vpop.xlane.xlu0 %162
  %v164 = vsel %vm139, %v127, 0.0
  %165 = vadd.xlane.f32.xlu0 %v164
  %v166 = vpop.xlane.xlu0 %165
  %v167 = vsel %vm139, %v128, 0.0
  %168 = vadd.xlane.f32.xlu0 %v167
  %v169 = vpop.xlane.xlu0 %168
  %v170 = vsel %vm139, %v129, 0.0
  %171 = vadd.xlane.f32.xlu0 %v170
  %v172 = vpop.xlane.xlu0 %171
  %v173 = vsel %vm139, %v130, 0.0
  %174 = vadd.xlane.f32.xlu0 %v173
  %v175 = vpop.xlane.xlu0 %174
  %v176 = vsel %vm139, %v131, 0.0
  %177 = vadd.xlane.f32.xlu0 %v176
  %v178 = vpop.xlane.xlu0 %177
  %v179 = vsel %vm139, %v132, 0.0
  %180 = vadd.xlane.f32.xlu0 %v179
  %v181 = vpop.xlane.xlu0 %180
  %v182 = vsel %vm139, %v133, 0.0
  %183 = vadd.xlane.f32.xlu0 %v182
  %v184 = vpop.xlane.xlu0 %183
  %v185 = vsel %vm139, %v134, 0.0
  %186 = vadd.xlane.f32.xlu0 %v185
  %v187 = vpop.xlane.xlu0 %186
  %v188 = vsel %vm139, %v135, 0.0
  %189 = vadd.xlane.f32.xlu0 %v188
  %v190 = vpop.xlane.xlu0 %189
  %v191 = vsel %vm139, %v136, 0.0
  %192 = vadd.xlane.f32.xlu0 %v191
  %v193 = vpop.xlane.xlu0 %192
  %v194 = vsel %vm139, %v137, 0.0
  %195 = vadd.xlane.f32.xlu0 %v194
  %v196 = vpop.xlane.xlu0 %195
  %v197 = vsel %vm139, %v138, 0.0
  %198 = vadd.xlane.f32.xlu0 %v197
  %v199 = vpop.xlane.xlu0 %198
  %v201 = vlaneseq
  %v202 = vshrl.u32 %v201, 7
  %v203 = vsub.s32 0, %v202
  %v204 = vrot.slane %v103, %v203
  %v206 = vmul.f32 %v142, %v204
  %v207 = vmul.f32 %v145, %v204
  %v208 = vmul.f32 %v148, %v204
  %v209 = vmul.f32 %v151, %v204
  %v210 = vmul.f32 %v154, %v204
  %v211 = vmul.f32 %v157, %v204
  %v212 = vmul.f32 %v160, %v204
  %v213 = vmul.f32 %v163, %v204
  %v214 = vmul.f32 %v166, %v204
  %v215 = vmul.f32 %v169, %v204
  %v216 = vmul.f32 %v172, %v204
  %v217 = vmul.f32 %v175, %v204
  %v218 = vmul.f32 %v178, %v204
  %v219 = vmul.f32 %v181, %v204
  %v220 = vmul.f32 %v184, %v204
  %v221 = vmul.f32 %v187, %v204
  %v222 = vmul.f32 %v190, %v204
  %v223 = vmul.f32 %v193, %v204
  %v224 = vmul.f32 %v196, %v204
  %v225 = vmul.f32 %v199, %v204
  %v227 = vlaneseq
  %v228 = vshrl.u32 %v227, 7
  %v229 = vsub.s32 0, %v228
  %v230 = vrot.slane %v104, %v229
  %v232 = vadd.f32 %v206, %v230
  %v233 = vadd.f32 %v207, %v230
  %v234 = vadd.f32 %v208, %v230
  %v235 = vadd.f32 %v209, %v230
  %v236 = vadd.f32 %v210, %v230
  %v237 = vadd.f32 %v211, %v230
  %v238 = vadd.f32 %v212, %v230
  %v239 = vadd.f32 %v213, %v230
  %v240 = vadd.f32 %v214, %v230
  %v241 = vadd.f32 %v215, %v230
  %v242 = vadd.f32 %v216, %v230
  %v243 = vadd.f32 %v217, %v230
  %v244 = vadd.f32 %v218, %v230
  %v245 = vadd.f32 %v219, %v230
  %v246 = vadd.f32 %v220, %v230
  %v247 = vadd.f32 %v221, %v230
  %v248 = vadd.f32 %v222, %v230
  %v249 = vadd.f32 %v223, %v230
  %v250 = vadd.f32 %v224, %v230
  %v251 = vadd.f32 %v225, %v230
  %v252 = vpack.c.bf16 %v233, %v232
  %v253 = vpack.c.bf16 %v235, %v234
  %v254 = vpack.c.bf16 %v237, %v236
  %v255 = vpack.c.bf16 %v239, %v238
  %v256 = vpack.c.bf16 %v241, %v240
  %v257 = vpack.c.bf16 %v243, %v242
  %v258 = vpack.c.bf16 %v245, %v244
  %v259 = vpack.c.bf16 %v247, %v246
  %v260 = vpack.c.bf16 %v249, %v248
  %v261 = vpack.c.bf16 %v251, %v250
  %vm262 = vcmask 261120
  %v264 = vsel %vm262, %v252, 0
  %v267 = vsel %vm262, %v253, 0
  %v270 = vsel %vm262, %v254, 0
  %v273 = vsel %vm262, %v255, 0
  %v276 = vsel %vm262, %v256, 0
  %v279 = vsel %vm262, %v257, 0
  %v282 = vsel %vm262, %v258, 0
  %v285 = vsel %vm262, %v259, 0
  %v288 = vsel %vm262, %v260, 0
  %v291 = vsel %vm262, %v261, 0
  %293 = vmatprep.subr.bf16.mxu0 0
  %294 = vmatpush1.bf16.msra.mxu0 %v109
  %295 = vmatprep.subr.bf16.mxu0 0
  %296 = vmatpush1.bf16.msra.mxu0 %v110
  %297 = vmatprep.subr.bf16.mxu0 0
  %298 = vmatpush1.bf16.msra.mxu0 0
  %299 = vmatprep.subr.bf16.mxu0 0
  %300 = vmatpush1.bf16.msra.mxu0 0
  %301 = vmatprep.subr.bf16.mxu0 0
  %302 = vmatpush1.bf16.msra.mxu0 0
  %303 = vmatprep.subr.bf16.mxu0 0
  %304 = vmatpush1.bf16.msra.mxu0 0
  %305 = vmatprep.subr.bf16.mxu0 0
  %306 = vmatpush1.bf16.msra.mxu0 0
  %307 = vmatprep.subr.bf16.mxu0 0
  %308 = vmatpush1.bf16.msra.mxu0 0
  %309 = vmatprep.subr.bf16.mxu0 0
  %310 = vmatpush1.bf16.msra.mxu0 0
  %311 = vmatprep.subr.bf16.mxu0 0
  %312 = vmatpush1.bf16.msra.mxu0 0
  %313 = vmatprep.subr.bf16.mxu0 0
  %314 = vmatpush1.bf16.msra.mxu0 0
  %315 = vmatprep.subr.bf16.mxu0 0
  %316 = vmatpush1.bf16.msra.mxu0 0
  %317 = vmatprep.subr.bf16.mxu0 0
  %318 = vmatpush1.bf16.msra.mxu0 0
  %319 = vmatprep.subr.bf16.mxu0 0
  %320 = vmatpush1.bf16.msra.mxu0 0
  %321 = vmatprep.subr.bf16.mxu0 0
  %322 = vmatpush1.bf16.msra.mxu0 0
  %323 = vmatprep.subr.bf16.mxu0 0
  %324 = vmatpush1.bf16.msra.mxu0 0
  %325 = vmatprep.mubr.bf16.mxu0 0
  %326 = vmatmul.mubr.bf16.gmra.mrb[0].mxu0 %v264
  %v327 = vpop.f32.mrb[0].mxu0
  %v328 = vadd.f32 0.0, %v327
  %v329 = vpop.f32.mrb[0].mxu0
  %v330 = vpop.f32.mrb[0].mxu0
  %v331 = vadd.f32 0.0, %v330
  %v332 = vpop.f32.mrb[0].mxu0
  %333 = vmatprep.mubr.bf16.mxu0 0
  %334 = vmatmul.mubr.bf16.gmra.mrb[0].mxu0 %v267
  %v335 = vpop.f32.mrb[0].mxu0
  %v336 = vadd.f32 0.0, %v335
  %v337 = vpop.f32.mrb[0].mxu0
  %v338 = vpop.f32.mrb[0].mxu0
  %v339 = vadd.f32 0.0, %v338
  %v340 = vpop.f32.mrb[0].mxu0
  %341 = vmatprep.mubr.bf16.mxu0 0
  %342 = vmatmul.mubr.bf16.gmra.mrb[0].mxu0 %v270
  %v343 = vpop.f32.mrb[0].mxu0
  %v344 = vadd.f32 0.0, %v343
  %v345 = vpop.f32.mrb[0].mxu0
  %v346 = vpop.f32.mrb[0].mxu0
  %v347 = vadd.f32 0.0, %v346
  %v348 = vpop.f32.mrb[0].mxu0
  %349 = vmatprep.mubr.bf16.mxu0 0
  %350 = vmatmul.mubr.bf16.gmra.mrb[0].mxu0 %v273
  %v351 = vpop.f32.mrb[0].mxu0
  %v352 = vadd.f32 0.0, %v351
  %v353 = vpop.f32.mrb[0].mxu0
  %v354 = vpop.f32.mrb[0].mxu0
  %v355 = vadd.f32 0.0, %v354
  %v356 = vpop.f32.mrb[0].mxu0
  %357 = vmatprep.mubr.bf16.mxu0 0
  %358 = vmatmul.mubr.bf16.gmra.mrb[0].mxu0 %v276
  %v359 = vpop.f32.mrb[0].mxu0
  %v360 = vadd.f32 0.0, %v359
  %v361 = vpop.f32.mrb[0].mxu0
  %v362 = vpop.f32.mrb[0].mxu0
  %v363 = vadd.f32 0.0, %v362
  %v364 = vpop.f32.mrb[0].mxu0
  %365 = vmatprep.mubr.bf16.mxu0 0
  %366 = vmatmul.mubr.bf16.gmra.mrb[0].mxu0 %v279
  %v367 = vpop.f32.mrb[0].mxu0
  %v368 = vadd.f32 0.0, %v367
  %v369 = vpop.f32.mrb[0].mxu0
  %v370 = vpop.f32.mrb[0].mxu0
  %v371 = vadd.f32 0.0, %v370
  %v372 = vpop.f32.mrb[0].mxu0
  %373 = vmatprep.mubr.bf16.mxu0 0
  %374 = vmatmul.mubr.bf16.gmra.mrb[0].mxu0 %v282
  %v375 = vpop.f32.mrb[0].mxu0
  %v376 = vadd.f32 0.0, %v375
  %v377 = vpop.f32.mrb[0].mxu0
  %v378 = vpop.f32.mrb[0].mxu0
  %v379 = vadd.f32 0.0, %v378
  %v380 = vpop.f32.mrb[0].mxu0
  %381 = vmatprep.mubr.bf16.mxu0 0
  %382 = vmatmul.mubr.bf16.gmra.mrb[0].mxu0 %v285
  %v383 = vpop.f32.mrb[0].mxu0
  %v384 = vadd.f32 0.0, %v383
  %v385 = vpop.f32.mrb[0].mxu0
  %v386 = vpop.f32.mrb[0].mxu0
  %v387 = vadd.f32 0.0, %v386
  %v388 = vpop.f32.mrb[0].mxu0
  %389 = vmatprep.mubr.bf16.mxu0 0
  %390 = vmatmul.mubr.bf16.gmra.mrb[0].mxu0 %v288
  %v391 = vpop.f32.mrb[0].mxu0
  %v392 = vadd.f32 0.0, %v391
  %v393 = vpop.f32.mrb[0].mxu0
  %v394 = vpop.f32.mrb[0].mxu0
  %v395 = vadd.f32 0.0, %v394
  %v396 = vpop.f32.mrb[0].mxu0
  %397 = vmatprep.mubr.bf16.mxu0 0
  %398 = vmatmul.mubr.bf16.gmra.mrb[0].mxu0 %v291
  %v399 = vpop.f32.mrb[0].mxu0
  %v400 = vadd.f32 0.0, %v399
  %v401 = vpop.f32.mrb[0].mxu0
  %v402 = vpop.f32.mrb[0].mxu0
  %v403 = vadd.f32 0.0, %v402
  %v404 = vpop.f32.mrb[0].mxu0
  %405 = vdwg.mxu0
  %407 = vset.pattern.permute.xlu0 0
  %408 = vperm.xlu0 %407, %v83
  %v409 = vpop.permute.xlu0 %408
  %412 = vset.pattern.permute.xlu0 0
  %413 = vperm.xlu0 %412, %v84
  %v414 = vpop.permute.xlu0 %413
  %417 = vset.pattern.permute.xlu0 0
  %418 = vperm.xlu0 %417, %v85
  %v419 = vpop.permute.xlu0 %418
  %422 = vset.pattern.permute.xlu0 0
  %423 = vperm.xlu0 %422, %v86
  %v424 = vpop.permute.xlu0 %423
  %427 = vset.pattern.permute.xlu0 0
  %428 = vperm.xlu0 %427, %v87
  %v429 = vpop.permute.xlu0 %428
  %432 = vset.pattern.permute.xlu0 0
  %433 = vperm.xlu0 %432, %v88
  %v434 = vpop.permute.xlu0 %433
  %437 = vset.pattern.permute.xlu0 0
  %438 = vperm.xlu0 %437, %v89
  %v439 = vpop.permute.xlu0 %438
  %442 = vset.pattern.permute.xlu0 0
  %443 = vperm.xlu0 %442, %v90
  %v444 = vpop.permute.xlu0 %443
  %447 = vset.pattern.permute.xlu0 0
  %448 = vperm.xlu0 %447, %v91
  %v449 = vpop.permute.xlu0 %448
  %452 = vset.pattern.permute.xlu0 0
  %453 = vperm.xlu0 %452, %v92
  %v454 = vpop.permute.xlu0 %453
  %457 = vset.pattern.permute.xlu0 0
  %458 = vperm.xlu0 %457, %v93
  %v459 = vpop.permute.xlu0 %458
  %462 = vset.pattern.permute.xlu0 0
  %463 = vperm.xlu0 %462, %v94
  %v464 = vpop.permute.xlu0 %463
  %467 = vset.pattern.permute.xlu0 0
  %468 = vperm.xlu0 %467, %v95
  %v469 = vpop.permute.xlu0 %468
  %472 = vset.pattern.permute.xlu0 0
  %473 = vperm.xlu0 %472, %v96
  %v474 = vpop.permute.xlu0 %473
  %477 = vset.pattern.permute.xlu0 0
  %478 = vperm.xlu0 %477, %v97
  %v479 = vpop.permute.xlu0 %478
  %482 = vset.pattern.permute.xlu0 0
  %483 = vperm.xlu0 %482, %v98
  %v484 = vpop.permute.xlu0 %483
  %487 = vset.pattern.permute.xlu0 0
  %488 = vperm.xlu0 %487, %v99
  %v489 = vpop.permute.xlu0 %488
  %492 = vset.pattern.permute.xlu0 0
  %493 = vperm.xlu0 %492, %v100
  %v494 = vpop.permute.xlu0 %493
  %497 = vset.pattern.permute.xlu0 0
  %498 = vperm.xlu0 %497, %v101
  %v499 = vpop.permute.xlu0 %498
  %502 = vset.pattern.permute.xlu0 0
  %503 = vperm.xlu0 %502, %v102
  %v504 = vpop.permute.xlu0 %503
  %v506 = vmul.f32 %v409, %v328
  %v507 = vmul.f32 %v414, %v331
  %v508 = vmul.f32 %v419, %v336
  %v509 = vmul.f32 %v424, %v339
  %v510 = vmul.f32 %v429, %v344
  %v511 = vmul.f32 %v434, %v347
  %v512 = vmul.f32 %v439, %v352
  %v513 = vmul.f32 %v444, %v355
  %v514 = vmul.f32 %v449, %v360
  %v515 = vmul.f32 %v454, %v363
  %v516 = vmul.f32 %v459, %v368
  %v517 = vmul.f32 %v464, %v371
  %v518 = vmul.f32 %v469, %v376
  %v519 = vmul.f32 %v474, %v379
  %v520 = vmul.f32 %v479, %v384
  %v521 = vmul.f32 %v484, %v387
  %v522 = vmul.f32 %v489, %v392
  %v523 = vmul.f32 %v494, %v395
  %v524 = vmul.f32 %v499, %v400
  %v525 = vmul.f32 %v504, %v403
  %v526 = vadd.f32 %v118, %v506
  %v527 = vadd.f32 %v118, %v507
  %v528 = vadd.f32 %v118, %v508
  %v529 = vadd.f32 %v118, %v509
  %v530 = vadd.f32 %v118, %v510
  %v531 = vadd.f32 %v118, %v511
  %v532 = vadd.f32 %v118, %v512
  %v533 = vadd.f32 %v118, %v513
  %v534 = vadd.f32 %v118, %v514
  %v535 = vadd.f32 %v118, %v515
  %v536 = vadd.f32 %v118, %v516
  %v537 = vadd.f32 %v118, %v517
  %v538 = vadd.f32 %v118, %v518
  %v539 = vadd.f32 %v118, %v519
  %v540 = vadd.f32 %v118, %v520
  %v541 = vadd.f32 %v118, %v521
  %v542 = vadd.f32 %v118, %v522
  %v543 = vadd.f32 %v118, %v523
  %v544 = vadd.f32 %v118, %v524
  %v545 = vadd.f32 %v118, %v525
  %566 = vrot.lane.b32.xlu0 %v43, 4
  %v567 = vpop.permute.xlu0 %566
  %568 = vrot.lane.b32.xlu0 %v44, 4
  %v569 = vpop.permute.xlu0 %568
  %570 = vrot.lane.b32.xlu0 %v45, 4
  %v571 = vpop.permute.xlu0 %570
  %572 = vrot.lane.b32.xlu0 %v46, 4
  %v573 = vpop.permute.xlu0 %572
  %574 = vrot.lane.b32.xlu0 %v47, 4
  %v575 = vpop.permute.xlu0 %574
  %576 = vrot.lane.b32.xlu0 %v48, 4
  %v577 = vpop.permute.xlu0 %576
  %578 = vrot.lane.b32.xlu0 %v49, 4
  %v579 = vpop.permute.xlu0 %578
  %580 = vrot.lane.b32.xlu0 %v50, 4
  %v581 = vpop.permute.xlu0 %580
  %582 = vrot.lane.b32.xlu0 %v51, 4
  %v583 = vpop.permute.xlu0 %582
  %584 = vrot.lane.b32.xlu0 %v52, 4
  %v585 = vpop.permute.xlu0 %584
  %586 = vrot.lane.b32.xlu0 %v53, 4
  %v587 = vpop.permute.xlu0 %586
  %588 = vrot.lane.b32.xlu0 %v54, 4
  %v589 = vpop.permute.xlu0 %588
  %590 = vrot.lane.b32.xlu0 %v55, 4
  %v591 = vpop.permute.xlu0 %590
  %592 = vrot.lane.b32.xlu0 %v56, 4
  %v593 = vpop.permute.xlu0 %592
  %594 = vrot.lane.b32.xlu0 %v57, 4
  %v595 = vpop.permute.xlu0 %594
  %596 = vrot.lane.b32.xlu0 %v58, 4
  %v597 = vpop.permute.xlu0 %596
  %598 = vrot.lane.b32.xlu0 %v59, 4
  %v599 = vpop.permute.xlu0 %598
  %600 = vrot.lane.b32.xlu0 %v60, 4
  %v601 = vpop.permute.xlu0 %600
  %602 = vrot.lane.b32.xlu0 %v61, 4
  %v603 = vpop.permute.xlu0 %602
  %604 = vrot.lane.b32.xlu0 %v62, 4
  %v605 = vpop.permute.xlu0 %604
  %v626 = vmul.f32 %v63, %v567
  %v627 = vmul.f32 %v64, %v569
  %v628 = vmul.f32 %v65, %v571
  %v629 = vmul.f32 %v66, %v573
  %v630 = vmul.f32 %v67, %v575
  %v631 = vmul.f32 %v68, %v577
  %v632 = vmul.f32 %v69, %v579
  %v633 = vmul.f32 %v70, %v581
  %v634 = vmul.f32 %v71, %v583
  %v635 = vmul.f32 %v72, %v585
  %v636 = vmul.f32 %v73, %v587
  %v637 = vmul.f32 %v74, %v589
  %v638 = vmul.f32 %v75, %v591
  %v639 = vmul.f32 %v76, %v593
  %v640 = vmul.f32 %v77, %v595
  %v641 = vmul.f32 %v78, %v597
  %v642 = vmul.f32 %v79, %v599
  %v643 = vmul.f32 %v80, %v601
  %v644 = vmul.f32 %v81, %v603
  %v645 = vmul.f32 %v82, %v605
  %666 = vrot.lane.b32.xlu0 %v626, 124
  %v667 = vpop.permute.xlu0 %666
  %668 = vrot.lane.b32.xlu0 %v627, 124
  %v669 = vpop.permute.xlu0 %668
  %670 = vrot.lane.b32.xlu0 %v628, 124
  %v671 = vpop.permute.xlu0 %670
  %672 = vrot.lane.b32.xlu0 %v629, 124
  %v673 = vpop.permute.xlu0 %672
  %674 = vrot.lane.b32.xlu0 %v630, 124
  %v675 = vpop.permute.xlu0 %674
  %676 = vrot.lane.b32.xlu0 %v631, 124
  %v677 = vpop.permute.xlu0 %676
  %678 = vrot.lane.b32.xlu0 %v632, 124
  %v679 = vpop.permute.xlu0 %678
  %680 = vrot.lane.b32.xlu0 %v633, 124
  %v681 = vpop.permute.xlu0 %680
  %682 = vrot.lane.b32.xlu0 %v634, 124
  %v683 = vpop.permute.xlu0 %682
  %684 = vrot.lane.b32.xlu0 %v635, 124
  %v685 = vpop.permute.xlu0 %684
  %686 = vrot.lane.b32.xlu0 %v636, 124
  %v687 = vpop.permute.xlu0 %686
  %688 = vrot.lane.b32.xlu0 %v637, 124
  %v689 = vpop.permute.xlu0 %688
  %690 = vrot.lane.b32.xlu0 %v638, 124
  %v691 = vpop.permute.xlu0 %690
  %692 = vrot.lane.b32.xlu0 %v639, 124
  %v693 = vpop.permute.xlu0 %692
  %694 = vrot.lane.b32.xlu0 %v640, 124
  %v695 = vpop.permute.xlu0 %694
  %696 = vrot.lane.b32.xlu0 %v641, 124
  %v697 = vpop.permute.xlu0 %696
  %698 = vrot.lane.b32.xlu0 %v642, 124
  %v699 = vpop.permute.xlu0 %698
  %700 = vrot.lane.b32.xlu0 %v643, 124
  %v701 = vpop.permute.xlu0 %700
  %702 = vrot.lane.b32.xlu0 %v644, 124
  %v703 = vpop.permute.xlu0 %702
  %704 = vrot.lane.b32.xlu0 %v645, 124
  %v705 = vpop.permute.xlu0 %704
  %v726 = vsel %vm139, %v667, 0.0
  %727 = vadd.xlane.f32.xlu0 %v726
  %v728 = vpop.xlane.xlu0 %727
  %v729 = vsel %vm139, %v669, 0.0
  %730 = vadd.xlane.f32.xlu0 %v729
  %v731 = vpop.xlane.xlu0 %730
  %v732 = vsel %vm139, %v671, 0.0
  %733 = vadd.xlane.f32.xlu0 %v732
  %v734 = vpop.xlane.xlu0 %733
  %v735 = vsel %vm139, %v673, 0.0
  %736 = vadd.xlane.f32.xlu0 %v735
  %v737 = vpop.xlane.xlu0 %736
  %v738 = vsel %vm139, %v675, 0.0
  %739 = vadd.xlane.f32.xlu0 %v738
  %v740 = vpop.xlane.xlu0 %739
  %v741 = vsel %vm139, %v677, 0.0
  %742 = vadd.xlane.f32.xlu0 %v741
  %v743 = vpop.xlane.xlu0 %742
  %v744 = vsel %vm139, %v679, 0.0
  %745 = vadd.xlane.f32.xlu0 %v744
  %v746 = vpop.xlane.xlu0 %745
  %v747 = vsel %vm139, %v681, 0.0
  %748 = vadd.xlane.f32.xlu0 %v747
  %v749 = vpop.xlane.xlu0 %748
  %v750 = vsel %vm139, %v683, 0.0
  %751 = vadd.xlane.f32.xlu0 %v750
  %v752 = vpop.xlane.xlu0 %751
  %v753 = vsel %vm139, %v685, 0.0
  %754 = vadd.xlane.f32.xlu0 %v753
  %v755 = vpop.xlane.xlu0 %754
  %v756 = vsel %vm139, %v687, 0.0
  %757 = vadd.xlane.f32.xlu0 %v756
  %v758 = vpop.xlane.xlu0 %757
  %v759 = vsel %vm139, %v689, 0.0
  %760 = vadd.xlane.f32.xlu0 %v759
  %v761 = vpop.xlane.xlu0 %760
  %v762 = vsel %vm139, %v691, 0.0
  %763 = vadd.xlane.f32.xlu0 %v762
  %v764 = vpop.xlane.xlu0 %763
  %v765 = vsel %vm139, %v693, 0.0
  %766 = vadd.xlane.f32.xlu0 %v765
  %v767 = vpop.xlane.xlu0 %766
  %v768 = vsel %vm139, %v695, 0.0
  %769 = vadd.xlane.f32.xlu0 %v768
  %v770 = vpop.xlane.xlu0 %769
  %v771 = vsel %vm139, %v697, 0.0
  %772 = vadd.xlane.f32.xlu0 %v771
  %v773 = vpop.xlane.xlu0 %772
  %v774 = vsel %vm139, %v699, 0.0
  %775 = vadd.xlane.f32.xlu0 %v774
  %v776 = vpop.xlane.xlu0 %775
  %v777 = vsel %vm139, %v701, 0.0
  %778 = vadd.xlane.f32.xlu0 %v777
  %v779 = vpop.xlane.xlu0 %778
  %v780 = vsel %vm139, %v703, 0.0
  %781 = vadd.xlane.f32.xlu0 %v780
  %v782 = vpop.xlane.xlu0 %781
  %v783 = vsel %vm139, %v705, 0.0
  %784 = vadd.xlane.f32.xlu0 %v783
  %v785 = vpop.xlane.xlu0 %784
  %v786 = vmul.f32 %v728, %v204
  %v787 = vmul.f32 %v731, %v204
  %v788 = vmul.f32 %v734, %v204
  %v789 = vmul.f32 %v737, %v204
  %v790 = vmul.f32 %v740, %v204
  %v791 = vmul.f32 %v743, %v204
  %v792 = vmul.f32 %v746, %v204
  %v793 = vmul.f32 %v749, %v204
  %v794 = vmul.f32 %v752, %v204
  %v795 = vmul.f32 %v755, %v204
  %v796 = vmul.f32 %v758, %v204
  %v797 = vmul.f32 %v761, %v204
  %v798 = vmul.f32 %v764, %v204
  %v799 = vmul.f32 %v767, %v204
  %v800 = vmul.f32 %v770, %v204
  %v801 = vmul.f32 %v773, %v204
  %v802 = vmul.f32 %v776, %v204
  %v803 = vmul.f32 %v779, %v204
  %v804 = vmul.f32 %v782, %v204
  %v805 = vmul.f32 %v785, %v204
  %v806 = vadd.f32 %v786, %v230
  %v807 = vadd.f32 %v787, %v230
  %v808 = vadd.f32 %v788, %v230
  %v809 = vadd.f32 %v789, %v230
  %v810 = vadd.f32 %v790, %v230
  %v811 = vadd.f32 %v791, %v230
  %v812 = vadd.f32 %v792, %v230
  %v813 = vadd.f32 %v793, %v230
  %v814 = vadd.f32 %v794, %v230
  %v815 = vadd.f32 %v795, %v230
  %v816 = vadd.f32 %v796, %v230
  %v817 = vadd.f32 %v797, %v230
  %v818 = vadd.f32 %v798, %v230
  %v819 = vadd.f32 %v799, %v230
  %v820 = vadd.f32 %v800, %v230
  %v821 = vadd.f32 %v801, %v230
  %v822 = vadd.f32 %v802, %v230
  %v823 = vadd.f32 %v803, %v230
  %v824 = vadd.f32 %v804, %v230
  %v825 = vadd.f32 %v805, %v230
  %v826 = vpack.c.bf16 %v807, %v806
  %v827 = vpack.c.bf16 %v809, %v808
  %v828 = vpack.c.bf16 %v811, %v810
  %v829 = vpack.c.bf16 %v813, %v812
  %v830 = vpack.c.bf16 %v815, %v814
  %v831 = vpack.c.bf16 %v817, %v816
  %v832 = vpack.c.bf16 %v819, %v818
  %v833 = vpack.c.bf16 %v821, %v820
  %v834 = vpack.c.bf16 %v823, %v822
  %v835 = vpack.c.bf16 %v825, %v824
  %v837 = vsel %vm262, %v826, 0
  %v840 = vsel %vm262, %v827, 0
  %v843 = vsel %vm262, %v828, 0
  %v846 = vsel %vm262, %v829, 0
  %v849 = vsel %vm262, %v830, 0
  %v852 = vsel %vm262, %v831, 0
  %v855 = vsel %vm262, %v832, 0
  %v858 = vsel %vm262, %v833, 0
  %v861 = vsel %vm262, %v834, 0
  %v864 = vsel %vm262, %v835, 0
  %866 = vmatprep.subr.bf16.mxu0 0
  %867 = vmatpush1.bf16.msra.mxu0 %v109
  %868 = vmatprep.subr.bf16.mxu0 0
  %869 = vmatpush1.bf16.msra.mxu0 %v110
  %870 = vmatprep.subr.bf16.mxu0 0
  %871 = vmatpush1.bf16.msra.mxu0 0
  %872 = vmatprep.subr.bf16.mxu0 0
  %873 = vmatpush1.bf16.msra.mxu0 0
  %874 = vmatprep.subr.bf16.mxu0 0
  %875 = vmatpush1.bf16.msra.mxu0 0
  %876 = vmatprep.subr.bf16.mxu0 0
  %877 = vmatpush1.bf16.msra.mxu0 0
  %878 = vmatprep.subr.bf16.mxu0 0
  %879 = vmatpush1.bf16.msra.mxu0 0
  %880 = vmatprep.subr.bf16.mxu0 0
  %881 = vmatpush1.bf16.msra.mxu0 0
  %882 = vmatprep.subr.bf16.mxu0 0
  %883 = vmatpush1.bf16.msra.mxu0 0
  %884 = vmatprep.subr.bf16.mxu0 0
  %885 = vmatpush1.bf16.msra.mxu0 0
  %886 = vmatprep.subr.bf16.mxu0 0
  %887 = vmatpush1.bf16.msra.mxu0 0
  %888 = vmatprep.subr.bf16.mxu0 0
  %889 = vmatpush1.bf16.msra.mxu0 0
  %890 = vmatprep.subr.bf16.mxu0 0
  %891 = vmatpush1.bf16.msra.mxu0 0
  %892 = vmatprep.subr.bf16.mxu0 0
  %893 = vmatpush1.bf16.msra.mxu0 0
  %894 = vmatprep.subr.bf16.mxu0 0
  %895 = vmatpush1.bf16.msra.mxu0 0
  %896 = vmatprep.subr.bf16.mxu0 0
  %897 = vmatpush1.bf16.msra.mxu0 0
  %898 = vmatprep.mubr.bf16.mxu0 0
  %899 = vmatmul.mubr.bf16.gmra.mrb[0].mxu0 %v837
  %v900 = vpop.f32.mrb[0].mxu0
  %v901 = vadd.f32 0.0, %v900
  %v902 = vpop.f32.mrb[0].mxu0
  %v903 = vpop.f32.mrb[0].mxu0
  %v904 = vadd.f32 0.0, %v903
  %v905 = vpop.f32.mrb[0].mxu0
  %906 = vmatprep.mubr.bf16.mxu0 0
  %907 = vmatmul.mubr.bf16.gmra.mrb[0].mxu0 %v840
  %v908 = vpop.f32.mrb[0].mxu0
  %v909 = vadd.f32 0.0, %v908
  %v910 = vpop.f32.mrb[0].mxu0
  %v911 = vpop.f32.mrb[0].mxu0
  %v912 = vadd.f32 0.0, %v911
  %v913 = vpop.f32.mrb[0].mxu0
  %914 = vmatprep.mubr.bf16.mxu0 0
  %915 = vmatmul.mubr.bf16.gmra.mrb[0].mxu0 %v843
  %v916 = vpop.f32.mrb[0].mxu0
  %v917 = vadd.f32 0.0, %v916
  %v918 = vpop.f32.mrb[0].mxu0
  %v919 = vpop.f32.mrb[0].mxu0
  %v920 = vadd.f32 0.0, %v919
  %v921 = vpop.f32.mrb[0].mxu0
  %922 = vmatprep.mubr.bf16.mxu0 0
  %923 = vmatmul.mubr.bf16.gmra.mrb[0].mxu0 %v846
  %v924 = vpop.f32.mrb[0].mxu0
  %v925 = vadd.f32 0.0, %v924
  %v926 = vpop.f32.mrb[0].mxu0
  %v927 = vpop.f32.mrb[0].mxu0
  %v928 = vadd.f32 0.0, %v927
  %v929 = vpop.f32.mrb[0].mxu0
  %930 = vmatprep.mubr.bf16.mxu0 0
  %931 = vmatmul.mubr.bf16.gmra.mrb[0].mxu0 %v849
  %v932 = vpop.f32.mrb[0].mxu0
  %v933 = vadd.f32 0.0, %v932
  %v934 = vpop.f32.mrb[0].mxu0
  %v935 = vpop.f32.mrb[0].mxu0
  %v936 = vadd.f32 0.0, %v935
  %v937 = vpop.f32.mrb[0].mxu0
  %938 = vmatprep.mubr.bf16.mxu0 0
  %939 = vmatmul.mubr.bf16.gmra.mrb[0].mxu0 %v852
  %v940 = vpop.f32.mrb[0].mxu0
  %v941 = vadd.f32 0.0, %v940
  %v942 = vpop.f32.mrb[0].mxu0
  %v943 = vpop.f32.mrb[0].mxu0
  %v944 = vadd.f32 0.0, %v943
  %v945 = vpop.f32.mrb[0].mxu0
  %946 = vmatprep.mubr.bf16.mxu0 0
  %947 = vmatmul.mubr.bf16.gmra.mrb[0].mxu0 %v855
  %v948 = vpop.f32.mrb[0].mxu0
  %v949 = vadd.f32 0.0, %v948
  %v950 = vpop.f32.mrb[0].mxu0
  %v951 = vpop.f32.mrb[0].mxu0
  %v952 = vadd.f32 0.0, %v951
  %v953 = vpop.f32.mrb[0].mxu0
  %954 = vmatprep.mubr.bf16.mxu0 0
  %955 = vmatmul.mubr.bf16.gmra.mrb[0].mxu0 %v858
  %v956 = vpop.f32.mrb[0].mxu0
  %v957 = vadd.f32 0.0, %v956
  %v958 = vpop.f32.mrb[0].mxu0
  %v959 = vpop.f32.mrb[0].mxu0
  %v960 = vadd.f32 0.0, %v959
  %v961 = vpop.f32.mrb[0].mxu0
  %962 = vmatprep.mubr.bf16.mxu0 0
  %963 = vmatmul.mubr.bf16.gmra.mrb[0].mxu0 %v861
  %v964 = vpop.f32.mrb[0].mxu0
  %v965 = vadd.f32 0.0, %v964
  %v966 = vpop.f32.mrb[0].mxu0
  %v967 = vpop.f32.mrb[0].mxu0
  %v968 = vadd.f32 0.0, %v967
  %v969 = vpop.f32.mrb[0].mxu0
  %970 = vmatprep.mubr.bf16.mxu0 0
  %971 = vmatmul.mubr.bf16.gmra.mrb[0].mxu0 %v864
  %v972 = vpop.f32.mrb[0].mxu0
  %v973 = vadd.f32 0.0, %v972
  %v974 = vpop.f32.mrb[0].mxu0
  %v975 = vpop.f32.mrb[0].mxu0
  %v976 = vadd.f32 0.0, %v975
  %v977 = vpop.f32.mrb[0].mxu0
  %978 = vdwg.mxu0
  %979 = vset.pattern.permute.xlu0 1
  %980 = vperm.xlu0 %979, %v83
  %v981 = vpop.permute.xlu0 %980
  %983 = vset.pattern.permute.xlu0 1
  %984 = vperm.xlu0 %983, %v84
  %v985 = vpop.permute.xlu0 %984
  %987 = vset.pattern.permute.xlu0 1
  %988 = vperm.xlu0 %987, %v85
  %v989 = vpop.permute.xlu0 %988
  %991 = vset.pattern.permute.xlu0 1
  %992 = vperm.xlu0 %991, %v86
  %v993 = vpop.permute.xlu0 %992
  %995 = vset.pattern.permute.xlu0 1
  %996 = vperm.xlu0 %995, %v87
  %v997 = vpop.permute.xlu0 %996
  %999 = vset.pattern.permute.xlu0 1
  %1000 = vperm.xlu0 %999, %v88
  %v1001 = vpop.permute.xlu0 %1000
  %1003 = vset.pattern.permute.xlu0 1
  %1004 = vperm.xlu0 %1003, %v89
  %v1005 = vpop.permute.xlu0 %1004
  %1007 = vset.pattern.permute.xlu0 1
  %1008 = vperm.xlu0 %1007, %v90
  %v1009 = vpop.permute.xlu0 %1008
  %1011 = vset.pattern.permute.xlu0 1
  %1012 = vperm.xlu0 %1011, %v91
  %v1013 = vpop.permute.xlu0 %1012
  %1015 = vset.pattern.permute.xlu0 1
  %1016 = vperm.xlu0 %1015, %v92
  %v1017 = vpop.permute.xlu0 %1016
  %1019 = vset.pattern.permute.xlu0 1
  %1020 = vperm.xlu0 %1019, %v93
  %v1021 = vpop.permute.xlu0 %1020
  %1023 = vset.pattern.permute.xlu0 1
  %1024 = vperm.xlu0 %1023, %v94
  %v1025 = vpop.permute.xlu0 %1024
  %1027 = vset.pattern.permute.xlu0 1
  %1028 = vperm.xlu0 %1027, %v95
  %v1029 = vpop.permute.xlu0 %1028
  %1031 = vset.pattern.permute.xlu0 1
  %1032 = vperm.xlu0 %1031, %v96
  %v1033 = vpop.permute.xlu0 %1032
  %1035 = vset.pattern.permute.xlu0 1
  %1036 = vperm.xlu0 %1035, %v97
  %v1037 = vpop.permute.xlu0 %1036
  %1039 = vset.pattern.permute.xlu0 1
  %1040 = vperm.xlu0 %1039, %v98
  %v1041 = vpop.permute.xlu0 %1040
  %1043 = vset.pattern.permute.xlu0 1
  %1044 = vperm.xlu0 %1043, %v99
  %v1045 = vpop.permute.xlu0 %1044
  %1047 = vset.pattern.permute.xlu0 1
  %1048 = vperm.xlu0 %1047, %v100
  %v1049 = vpop.permute.xlu0 %1048
  %1051 = vset.pattern.permute.xlu0 1
  %1052 = vperm.xlu0 %1051, %v101
  %v1053 = vpop.permute.xlu0 %1052
  %1055 = vset.pattern.permute.xlu0 1
  %1056 = vperm.xlu0 %1055, %v102
  %v1057 = vpop.permute.xlu0 %1056
  %v1059 = vmul.f32 %v981, %v901
  %v1060 = vmul.f32 %v985, %v904
  %v1061 = vmul.f32 %v989, %v909
  %v1062 = vmul.f32 %v993, %v912
  %v1063 = vmul.f32 %v997, %v917
  %v1064 = vmul.f32 %v1001, %v920
  %v1065 = vmul.f32 %v1005, %v925
  %v1066 = vmul.f32 %v1009, %v928
  %v1067 = vmul.f32 %v1013, %v933
  %v1068 = vmul.f32 %v1017, %v936
  %v1069 = vmul.f32 %v1021, %v941
  %v1070 = vmul.f32 %v1025, %v944
  %v1071 = vmul.f32 %v1029, %v949
  %v1072 = vmul.f32 %v1033, %v952
  %v1073 = vmul.f32 %v1037, %v957
  %v1074 = vmul.f32 %v1041, %v960
  %v1075 = vmul.f32 %v1045, %v965
  %v1076 = vmul.f32 %v1049, %v968
  %v1077 = vmul.f32 %v1053, %v973
  %v1078 = vmul.f32 %v1057, %v976
  %v1079 = vadd.f32 %v526, %v1059
  %v1080 = vadd.f32 %v527, %v1060
  %v1081 = vadd.f32 %v528, %v1061
  %v1082 = vadd.f32 %v529, %v1062
  %v1083 = vadd.f32 %v530, %v1063
  %v1084 = vadd.f32 %v531, %v1064
  %v1085 = vadd.f32 %v532, %v1065
  %v1086 = vadd.f32 %v533, %v1066
  %v1087 = vadd.f32 %v534, %v1067
  %v1088 = vadd.f32 %v535, %v1068
  %v1089 = vadd.f32 %v536, %v1069
  %v1090 = vadd.f32 %v537, %v1070
  %v1091 = vadd.f32 %v538, %v1071
  %v1092 = vadd.f32 %v539, %v1072
  %v1093 = vadd.f32 %v540, %v1073
  %v1094 = vadd.f32 %v541, %v1074
  %v1095 = vadd.f32 %v542, %v1075
  %v1096 = vadd.f32 %v543, %v1076
  %v1097 = vadd.f32 %v544, %v1077
  %v1098 = vadd.f32 %v545, %v1078
  %1099 = vrot.lane.b32.xlu0 %v43, 8
  %v1100 = vpop.permute.xlu0 %1099
  %1101 = vrot.lane.b32.xlu0 %v44, 8
  %v1102 = vpop.permute.xlu0 %1101
  %1103 = vrot.lane.b32.xlu0 %v45, 8
  %v1104 = vpop.permute.xlu0 %1103
  %1105 = vrot.lane.b32.xlu0 %v46, 8
  %v1106 = vpop.permute.xlu0 %1105
  %1107 = vrot.lane.b32.xlu0 %v47, 8
  %v1108 = vpop.permute.xlu0 %1107
  %1109 = vrot.lane.b32.xlu0 %v48, 8
  %v1110 = vpop.permute.xlu0 %1109
  %1111 = vrot.lane.b32.xlu0 %v49, 8
  %v1112 = vpop.permute.xlu0 %1111
  %1113 = vrot.lane.b32.xlu0 %v50, 8
  %v1114 = vpop.permute.xlu0 %1113
  %1115 = vrot.lane.b32.xlu0 %v51, 8
  %v1116 = vpop.permute.xlu0 %1115
  %1117 = vrot.lane.b32.xlu0 %v52, 8
  %v1118 = vpop.permute.xlu0 %1117
  %1119 = vrot.lane.b32.xlu0 %v53, 8
  %v1120 = vpop.permute.xlu0 %1119
  %1121 = vrot.lane.b32.xlu0 %v54, 8
  %v1122 = vpop.permute.xlu0 %1121
  %1123 = vrot.lane.b32.xlu0 %v55, 8
  %v1124 = vpop.permute.xlu0 %1123
  %1125 = vrot.lane.b32.xlu0 %v56, 8
  %v1126 = vpop.permute.xlu0 %1125
  %1127 = vrot.lane.b32.xlu0 %v57, 8
  %v1128 = vpop.permute.xlu0 %1127
  %1129 = vrot.lane.b32.xlu0 %v58, 8
  %v1130 = vpop.permute.xlu0 %1129
  %1131 = vrot.lane.b32.xlu0 %v59, 8
  %v1132 = vpop.permute.xlu0 %1131
  %1133 = vrot.lane.b32.xlu0 %v60, 8
  %v1134 = vpop.permute.xlu0 %1133
  %1135 = vrot.lane.b32.xlu0 %v61, 8
  %v1136 = vpop.permute.xlu0 %1135
  %1137 = vrot.lane.b32.xlu0 %v62, 8
  %v1138 = vpop.permute.xlu0 %1137
  %v1159 = vmul.f32 %v63, %v1100
  %v1160 = vmul.f32 %v64, %v1102
  %v1161 = vmul.f32 %v65, %v1104
  %v1162 = vmul.f32 %v66, %v1106
  %v1163 = vmul.f32 %v67, %v1108
  %v1164 = vmul.f32 %v68, %v1110
  %v1165 = vmul.f32 %v69, %v1112
  %v1166 = vmul.f32 %v70, %v1114
  %v1167 = vmul.f32 %v71, %v1116
  %v1168 = vmul.f32 %v72, %v1118
  %v1169 = vmul.f32 %v73, %v1120
  %v1170 = vmul.f32 %v74, %v1122
  %v1171 = vmul.f32 %v75, %v1124
  %v1172 = vmul.f32 %v76, %v1126
  %v1173 = vmul.f32 %v77, %v1128
  %v1174 = vmul.f32 %v78, %v1130
  %v1175 = vmul.f32 %v79, %v1132
  %v1176 = vmul.f32 %v80, %v1134
  %v1177 = vmul.f32 %v81, %v1136
  %v1178 = vmul.f32 %v82, %v1138
  %1199 = vrot.lane.b32.xlu0 %v1159, 120
  %v1200 = vpop.permute.xlu0 %1199
  %1201 = vrot.lane.b32.xlu0 %v1160, 120
  %v1202 = vpop.permute.xlu0 %1201
  %1203 = vrot.lane.b32.xlu0 %v1161, 120
  %v1204 = vpop.permute.xlu0 %1203
  %1205 = vrot.lane.b32.xlu0 %v1162, 120
  %v1206 = vpop.permute.xlu0 %1205
  %1207 = vrot.lane.b32.xlu0 %v1163, 120
  %v1208 = vpop.permute.xlu0 %1207
  %1209 = vrot.lane.b32.xlu0 %v1164, 120
  %v1210 = vpop.permute.xlu0 %1209
  %1211 = vrot.lane.b32.xlu0 %v1165, 120
  %v1212 = vpop.permute.xlu0 %1211
  %1213 = vrot.lane.b32.xlu0 %v1166, 120
  %v1214 = vpop.permute.xlu0 %1213
  %1215 = vrot.lane.b32.xlu0 %v1167, 120
  %v1216 = vpop.permute.xlu0 %1215
  %1217 = vrot.lane.b32.xlu0 %v1168, 120
  %v1218 = vpop.permute.xlu0 %1217
  %1219 = vrot.lane.b32.xlu0 %v1169, 120
  %v1220 = vpop.permute.xlu0 %1219
  %1221 = vrot.lane.b32.xlu0 %v1170, 120
  %v1222 = vpop.permute.xlu0 %1221
  %1223 = vrot.lane.b32.xlu0 %v1171, 120
  %v1224 = vpop.permute.xlu0 %1223
  %1225 = vrot.lane.b32.xlu0 %v1172, 120
  %v1226 = vpop.permute.xlu0 %1225
  %1227 = vrot.lane.b32.xlu0 %v1173, 120
  %v1228 = vpop.permute.xlu0 %1227
  %1229 = vrot.lane.b32.xlu0 %v1174, 120
  %v1230 = vpop.permute.xlu0 %1229
  %1231 = vrot.lane.b32.xlu0 %v1175, 120
  %v1232 = vpop.permute.xlu0 %1231
  %1233 = vrot.lane.b32.xlu0 %v1176, 120
  %v1234 = vpop.permute.xlu0 %1233
  %1235 = vrot.lane.b32.xlu0 %v1177, 120
  %v1236 = vpop.permute.xlu0 %1235
  %1237 = vrot.lane.b32.xlu0 %v1178, 120
  %v1238 = vpop.permute.xlu0 %1237
  %v1259 = vsel %vm139, %v1200, 0.0
  %1260 = vadd.xlane.f32.xlu0 %v1259
  %v1261 = vpop.xlane.xlu0 %1260
  %v1262 = vsel %vm139, %v1202, 0.0
  %1263 = vadd.xlane.f32.xlu0 %v1262
  %v1264 = vpop.xlane.xlu0 %1263
  %v1265 = vsel %vm139, %v1204, 0.0
  %1266 = vadd.xlane.f32.xlu0 %v1265
  %v1267 = vpop.xlane.xlu0 %1266
  %v1268 = vsel %vm139, %v1206, 0.0
  %1269 = vadd.xlane.f32.xlu0 %v1268
  %v1270 = vpop.xlane.xlu0 %1269
  %v1271 = vsel %vm139, %v1208, 0.0
  %1272 = vadd.xlane.f32.xlu0 %v1271
  %v1273 = vpop.xlane.xlu0 %1272
  %v1274 = vsel %vm139, %v1210, 0.0
  %1275 = vadd.xlane.f32.xlu0 %v1274
  %v1276 = vpop.xlane.xlu0 %1275
  %v1277 = vsel %vm139, %v1212, 0.0
  %1278 = vadd.xlane.f32.xlu0 %v1277
  %v1279 = vpop.xlane.xlu0 %1278
  %v1280 = vsel %vm139, %v1214, 0.0
  %1281 = vadd.xlane.f32.xlu0 %v1280
  %v1282 = vpop.xlane.xlu0 %1281
  %v1283 = vsel %vm139, %v1216, 0.0
  %1284 = vadd.xlane.f32.xlu0 %v1283
  %v1285 = vpop.xlane.xlu0 %1284
  %v1286 = vsel %vm139, %v1218, 0.0
  %1287 = vadd.xlane.f32.xlu0 %v1286
  %v1288 = vpop.xlane.xlu0 %1287
  %v1289 = vsel %vm139, %v1220, 0.0
  %1290 = vadd.xlane.f32.xlu0 %v1289
  %v1291 = vpop.xlane.xlu0 %1290
  %v1292 = vsel %vm139, %v1222, 0.0
  %1293 = vadd.xlane.f32.xlu0 %v1292
  %v1294 = vpop.xlane.xlu0 %1293
  %v1295 = vsel %vm139, %v1224, 0.0
  %1296 = vadd.xlane.f32.xlu0 %v1295
  %v1297 = vpop.xlane.xlu0 %1296
  %v1298 = vsel %vm139, %v1226, 0.0
  %1299 = vadd.xlane.f32.xlu0 %v1298
  %v1300 = vpop.xlane.xlu0 %1299
  %v1301 = vsel %vm139, %v1228, 0.0
  %1302 = vadd.xlane.f32.xlu0 %v1301
  %v1303 = vpop.xlane.xlu0 %1302
  %v1304 = vsel %vm139, %v1230, 0.0
  %1305 = vadd.xlane.f32.xlu0 %v1304
  %v1306 = vpop.xlane.xlu0 %1305
  %v1307 = vsel %vm139, %v1232, 0.0
  %1308 = vadd.xlane.f32.xlu0 %v1307
  %v1309 = vpop.xlane.xlu0 %1308
  %v1310 = vsel %vm139, %v1234, 0.0
  %1311 = vadd.xlane.f32.xlu0 %v1310
  %v1312 = vpop.xlane.xlu0 %1311
  %v1313 = vsel %vm139, %v1236, 0.0
  %1314 = vadd.xlane.f32.xlu0 %v1313
  %v1315 = vpop.xlane.xlu0 %1314
  %v1316 = vsel %vm139, %v1238, 0.0
  %1317 = vadd.xlane.f32.xlu0 %v1316
  %v1318 = vpop.xlane.xlu0 %1317
  %v1319 = vmul.f32 %v1261, %v204
  %v1320 = vmul.f32 %v1264, %v204
  %v1321 = vmul.f32 %v1267, %v204
  %v1322 = vmul.f32 %v1270, %v204
  %v1323 = vmul.f32 %v1273, %v204
  %v1324 = vmul.f32 %v1276, %v204
  %v1325 = vmul.f32 %v1279, %v204
  %v1326 = vmul.f32 %v1282, %v204
  %v1327 = vmul.f32 %v1285, %v204
  %v1328 = vmul.f32 %v1288, %v204
  %v1329 = vmul.f32 %v1291, %v204
  %v1330 = vmul.f32 %v1294, %v204
  %v1331 = vmul.f32 %v1297, %v204
  %v1332 = vmul.f32 %v1300, %v204
  %v1333 = vmul.f32 %v1303, %v204
  %v1334 = vmul.f32 %v1306, %v204
  %v1335 = vmul.f32 %v1309, %v204
  %v1336 = vmul.f32 %v1312, %v204
  %v1337 = vmul.f32 %v1315, %v204
  %v1338 = vmul.f32 %v1318, %v204
  %v1339 = vadd.f32 %v1319, %v230
  %v1340 = vadd.f32 %v1320, %v230
  %v1341 = vadd.f32 %v1321, %v230
  %v1342 = vadd.f32 %v1322, %v230
  %v1343 = vadd.f32 %v1323, %v230
  %v1344 = vadd.f32 %v1324, %v230
  %v1345 = vadd.f32 %v1325, %v230
  %v1346 = vadd.f32 %v1326, %v230
  %v1347 = vadd.f32 %v1327, %v230
  %v1348 = vadd.f32 %v1328, %v230
  %v1349 = vadd.f32 %v1329, %v230
  %v1350 = vadd.f32 %v1330, %v230
  %v1351 = vadd.f32 %v1331, %v230
  %v1352 = vadd.f32 %v1332, %v230
  %v1353 = vadd.f32 %v1333, %v230
  %v1354 = vadd.f32 %v1334, %v230
  %v1355 = vadd.f32 %v1335, %v230
  %v1356 = vadd.f32 %v1336, %v230
  %v1357 = vadd.f32 %v1337, %v230
  %v1358 = vadd.f32 %v1338, %v230
  %v1359 = vpack.c.bf16 %v1340, %v1339
  %v1360 = vpack.c.bf16 %v1342, %v1341
  %v1361 = vpack.c.bf16 %v1344, %v1343
  %v1362 = vpack.c.bf16 %v1346, %v1345
  %v1363 = vpack.c.bf16 %v1348, %v1347
  %v1364 = vpack.c.bf16 %v1350, %v1349
  %v1365 = vpack.c.bf16 %v1352, %v1351
  %v1366 = vpack.c.bf16 %v1354, %v1353
  %v1367 = vpack.c.bf16 %v1356, %v1355
  %v1368 = vpack.c.bf16 %v1358, %v1357
  %v1370 = vsel %vm262, %v1359, 0
  %v1373 = vsel %vm262, %v1360, 0
  %v1376 = vsel %vm262, %v1361, 0
  %v1379 = vsel %vm262, %v1362, 0
  %v1382 = vsel %vm262, %v1363, 0
  %v1385 = vsel %vm262, %v1364, 0
  %v1388 = vsel %vm262, %v1365, 0
  %v1391 = vsel %vm262, %v1366, 0
  %v1394 = vsel %vm262, %v1367, 0
  %v1397 = vsel %vm262, %v1368, 0
  %1399 = vmatprep.subr.bf16.mxu0 0
  %1400 = vmatpush1.bf16.msra.mxu0 %v109
  %1401 = vmatprep.subr.bf16.mxu0 0
  %1402 = vmatpush1.bf16.msra.mxu0 %v110
  %1403 = vmatprep.subr.bf16.mxu0 0
  %1404 = vmatpush1.bf16.msra.mxu0 0
  %1405 = vmatprep.subr.bf16.mxu0 0
  %1406 = vmatpush1.bf16.msra.mxu0 0
  %1407 = vmatprep.subr.bf16.mxu0 0
  %1408 = vmatpush1.bf16.msra.mxu0 0
  %1409 = vmatprep.subr.bf16.mxu0 0
  %1410 = vmatpush1.bf16.msra.mxu0 0
  %1411 = vmatprep.subr.bf16.mxu0 0
  %1412 = vmatpush1.bf16.msra.mxu0 0
  %1413 = vmatprep.subr.bf16.mxu0 0
  %1414 = vmatpush1.bf16.msra.mxu0 0
  %1415 = vmatprep.subr.bf16.mxu0 0
  %1416 = vmatpush1.bf16.msra.mxu0 0
  %1417 = vmatprep.subr.bf16.mxu0 0
  %1418 = vmatpush1.bf16.msra.mxu0 0
  %1419 = vmatprep.subr.bf16.mxu0 0
  %1420 = vmatpush1.bf16.msra.mxu0 0
  %1421 = vmatprep.subr.bf16.mxu0 0
  %1422 = vmatpush1.bf16.msra.mxu0 0
  %1423 = vmatprep.subr.bf16.mxu0 0
  %1424 = vmatpush1.bf16.msra.mxu0 0
  %1425 = vmatprep.subr.bf16.mxu0 0
  %1426 = vmatpush1.bf16.msra.mxu0 0
  %1427 = vmatprep.subr.bf16.mxu0 0
  %1428 = vmatpush1.bf16.msra.mxu0 0
  %1429 = vmatprep.subr.bf16.mxu0 0
  %1430 = vmatpush1.bf16.msra.mxu0 0
  %1431 = vmatprep.mubr.bf16.mxu0 0
  %1432 = vmatmul.mubr.bf16.gmra.mrb[0].mxu0 %v1370
  %v1433 = vpop.f32.mrb[0].mxu0
  %v1434 = vadd.f32 0.0, %v1433
  %v1435 = vpop.f32.mrb[0].mxu0
  %v1436 = vpop.f32.mrb[0].mxu0
  %v1437 = vadd.f32 0.0, %v1436
  %v1438 = vpop.f32.mrb[0].mxu0
  %1439 = vmatprep.mubr.bf16.mxu0 0
  %1440 = vmatmul.mubr.bf16.gmra.mrb[0].mxu0 %v1373
  %v1441 = vpop.f32.mrb[0].mxu0
  %v1442 = vadd.f32 0.0, %v1441
  %v1443 = vpop.f32.mrb[0].mxu0
  %v1444 = vpop.f32.mrb[0].mxu0
  %v1445 = vadd.f32 0.0, %v1444
  %v1446 = vpop.f32.mrb[0].mxu0
  %1447 = vmatprep.mubr.bf16.mxu0 0
  %1448 = vmatmul.mubr.bf16.gmra.mrb[0].mxu0 %v1376
  %v1449 = vpop.f32.mrb[0].mxu0
  %v1450 = vadd.f32 0.0, %v1449
  %v1451 = vpop.f32.mrb[0].mxu0
  %v1452 = vpop.f32.mrb[0].mxu0
  %v1453 = vadd.f32 0.0, %v1452
  %v1454 = vpop.f32.mrb[0].mxu0
  %1455 = vmatprep.mubr.bf16.mxu0 0
  %1456 = vmatmul.mubr.bf16.gmra.mrb[0].mxu0 %v1379
  %v1457 = vpop.f32.mrb[0].mxu0
  %v1458 = vadd.f32 0.0, %v1457
  %v1459 = vpop.f32.mrb[0].mxu0
  %v1460 = vpop.f32.mrb[0].mxu0
  %v1461 = vadd.f32 0.0, %v1460
  %v1462 = vpop.f32.mrb[0].mxu0
  %1463 = vmatprep.mubr.bf16.mxu0 0
  %1464 = vmatmul.mubr.bf16.gmra.mrb[0].mxu0 %v1382
  %v1465 = vpop.f32.mrb[0].mxu0
  %v1466 = vadd.f32 0.0, %v1465
  %v1467 = vpop.f32.mrb[0].mxu0
  %v1468 = vpop.f32.mrb[0].mxu0
  %v1469 = vadd.f32 0.0, %v1468
  %v1470 = vpop.f32.mrb[0].mxu0
  %1471 = vmatprep.mubr.bf16.mxu0 0
  %1472 = vmatmul.mubr.bf16.gmra.mrb[0].mxu0 %v1385
  %v1473 = vpop.f32.mrb[0].mxu0
  %v1474 = vadd.f32 0.0, %v1473
  %v1475 = vpop.f32.mrb[0].mxu0
  %v1476 = vpop.f32.mrb[0].mxu0
  %v1477 = vadd.f32 0.0, %v1476
  %v1478 = vpop.f32.mrb[0].mxu0
  %1479 = vmatprep.mubr.bf16.mxu0 0
  %1480 = vmatmul.mubr.bf16.gmra.mrb[0].mxu0 %v1388
  %v1481 = vpop.f32.mrb[0].mxu0
  %v1482 = vadd.f32 0.0, %v1481
  %v1483 = vpop.f32.mrb[0].mxu0
  %v1484 = vpop.f32.mrb[0].mxu0
  %v1485 = vadd.f32 0.0, %v1484
  %v1486 = vpop.f32.mrb[0].mxu0
  %1487 = vmatprep.mubr.bf16.mxu0 0
  %1488 = vmatmul.mubr.bf16.gmra.mrb[0].mxu0 %v1391
  %v1489 = vpop.f32.mrb[0].mxu0
  %v1490 = vadd.f32 0.0, %v1489
  %v1491 = vpop.f32.mrb[0].mxu0
  %v1492 = vpop.f32.mrb[0].mxu0
  %v1493 = vadd.f32 0.0, %v1492
  %v1494 = vpop.f32.mrb[0].mxu0
  %1495 = vmatprep.mubr.bf16.mxu0 0
  %1496 = vmatmul.mubr.bf16.gmra.mrb[0].mxu0 %v1394
  %v1497 = vpop.f32.mrb[0].mxu0
  %v1498 = vadd.f32 0.0, %v1497
  %v1499 = vpop.f32.mrb[0].mxu0
  %v1500 = vpop.f32.mrb[0].mxu0
  %v1501 = vadd.f32 0.0, %v1500
  %v1502 = vpop.f32.mrb[0].mxu0
  %1503 = vmatprep.mubr.bf16.mxu0 0
  %1504 = vmatmul.mubr.bf16.gmra.mrb[0].mxu0 %v1397
  %v1505 = vpop.f32.mrb[0].mxu0
  %v1506 = vadd.f32 0.0, %v1505
  %v1507 = vpop.f32.mrb[0].mxu0
  %v1508 = vpop.f32.mrb[0].mxu0
  %v1509 = vadd.f32 0.0, %v1508
  %v1510 = vpop.f32.mrb[0].mxu0
  %1511 = vdwg.mxu0
  %1512 = vset.pattern.permute.xlu0 2
  %1513 = vperm.xlu0 %1512, %v83
  %v1514 = vpop.permute.xlu0 %1513
  %1516 = vset.pattern.permute.xlu0 2
  %1517 = vperm.xlu0 %1516, %v84
  %v1518 = vpop.permute.xlu0 %1517
  %1520 = vset.pattern.permute.xlu0 2
  %1521 = vperm.xlu0 %1520, %v85
  %v1522 = vpop.permute.xlu0 %1521
  %1524 = vset.pattern.permute.xlu0 2
  %1525 = vperm.xlu0 %1524, %v86
  %v1526 = vpop.permute.xlu0 %1525
  %1528 = vset.pattern.permute.xlu0 2
  %1529 = vperm.xlu0 %1528, %v87
  %v1530 = vpop.permute.xlu0 %1529
  %1532 = vset.pattern.permute.xlu0 2
  %1533 = vperm.xlu0 %1532, %v88
  %v1534 = vpop.permute.xlu0 %1533
  %1536 = vset.pattern.permute.xlu0 2
  %1537 = vperm.xlu0 %1536, %v89
  %v1538 = vpop.permute.xlu0 %1537
  %1540 = vset.pattern.permute.xlu0 2
  %1541 = vperm.xlu0 %1540, %v90
  %v1542 = vpop.permute.xlu0 %1541
  %1544 = vset.pattern.permute.xlu0 2
  %1545 = vperm.xlu0 %1544, %v91
  %v1546 = vpop.permute.xlu0 %1545
  %1548 = vset.pattern.permute.xlu0 2
  %1549 = vperm.xlu0 %1548, %v92
  %v1550 = vpop.permute.xlu0 %1549
  %1552 = vset.pattern.permute.xlu0 2
  %1553 = vperm.xlu0 %1552, %v93
  %v1554 = vpop.permute.xlu0 %1553
  %1556 = vset.pattern.permute.xlu0 2
  %1557 = vperm.xlu0 %1556, %v94
  %v1558 = vpop.permute.xlu0 %1557
  %1560 = vset.pattern.permute.xlu0 2
  %1561 = vperm.xlu0 %1560, %v95
  %v1562 = vpop.permute.xlu0 %1561
  %1564 = vset.pattern.permute.xlu0 2
  %1565 = vperm.xlu0 %1564, %v96
  %v1566 = vpop.permute.xlu0 %1565
  %1568 = vset.pattern.permute.xlu0 2
  %1569 = vperm.xlu0 %1568, %v97
  %v1570 = vpop.permute.xlu0 %1569
  %1572 = vset.pattern.permute.xlu0 2
  %1573 = vperm.xlu0 %1572, %v98
  %v1574 = vpop.permute.xlu0 %1573
  %1576 = vset.pattern.permute.xlu0 2
  %1577 = vperm.xlu0 %1576, %v99
  %v1578 = vpop.permute.xlu0 %1577
  %1580 = vset.pattern.permute.xlu0 2
  %1581 = vperm.xlu0 %1580, %v100
  %v1582 = vpop.permute.xlu0 %1581
  %1584 = vset.pattern.permute.xlu0 2
  %1585 = vperm.xlu0 %1584, %v101
  %v1586 = vpop.permute.xlu0 %1585
  %1588 = vset.pattern.permute.xlu0 2
  %1589 = vperm.xlu0 %1588, %v102
  %v1590 = vpop.permute.xlu0 %1589
  %v1592 = vmul.f32 %v1514, %v1434
  %v1593 = vmul.f32 %v1518, %v1437
  %v1594 = vmul.f32 %v1522, %v1442
  %v1595 = vmul.f32 %v1526, %v1445
  %v1596 = vmul.f32 %v1530, %v1450
  %v1597 = vmul.f32 %v1534, %v1453
  %v1598 = vmul.f32 %v1538, %v1458
  %v1599 = vmul.f32 %v1542, %v1461
  %v1600 = vmul.f32 %v1546, %v1466
  %v1601 = vmul.f32 %v1550, %v1469
  %v1602 = vmul.f32 %v1554, %v1474
  %v1603 = vmul.f32 %v1558, %v1477
  %v1604 = vmul.f32 %v1562, %v1482
  %v1605 = vmul.f32 %v1566, %v1485
  %v1606 = vmul.f32 %v1570, %v1490
  %v1607 = vmul.f32 %v1574, %v1493
  %v1608 = vmul.f32 %v1578, %v1498
  %v1609 = vmul.f32 %v1582, %v1501
  %v1610 = vmul.f32 %v1586, %v1506
  %v1611 = vmul.f32 %v1590, %v1509
  %v1612 = vadd.f32 %v1079, %v1592
  %v1613 = vadd.f32 %v1080, %v1593
  %v1614 = vadd.f32 %v1081, %v1594
  %v1615 = vadd.f32 %v1082, %v1595
  %v1616 = vadd.f32 %v1083, %v1596
  %v1617 = vadd.f32 %v1084, %v1597
  %v1618 = vadd.f32 %v1085, %v1598
  %v1619 = vadd.f32 %v1086, %v1599
  %v1620 = vadd.f32 %v1087, %v1600
  %v1621 = vadd.f32 %v1088, %v1601
  %v1622 = vadd.f32 %v1089, %v1602
  %v1623 = vadd.f32 %v1090, %v1603
  %v1624 = vadd.f32 %v1091, %v1604
  %v1625 = vadd.f32 %v1092, %v1605
  %v1626 = vadd.f32 %v1093, %v1606
  %v1627 = vadd.f32 %v1094, %v1607
  %v1628 = vadd.f32 %v1095, %v1608
  %v1629 = vadd.f32 %v1096, %v1609
  %v1630 = vadd.f32 %v1097, %v1610
  %v1631 = vadd.f32 %v1098, %v1611
  %1632 = vrot.lane.b32.xlu0 %v43, 12
  %v1633 = vpop.permute.xlu0 %1632
  %1634 = vrot.lane.b32.xlu0 %v44, 12
  %v1635 = vpop.permute.xlu0 %1634
  %1636 = vrot.lane.b32.xlu0 %v45, 12
  %v1637 = vpop.permute.xlu0 %1636
  %1638 = vrot.lane.b32.xlu0 %v46, 12
  %v1639 = vpop.permute.xlu0 %1638
  %1640 = vrot.lane.b32.xlu0 %v47, 12
  %v1641 = vpop.permute.xlu0 %1640
  %1642 = vrot.lane.b32.xlu0 %v48, 12
  %v1643 = vpop.permute.xlu0 %1642
  %1644 = vrot.lane.b32.xlu0 %v49, 12
  %v1645 = vpop.permute.xlu0 %1644
  %1646 = vrot.lane.b32.xlu0 %v50, 12
  %v1647 = vpop.permute.xlu0 %1646
  %1648 = vrot.lane.b32.xlu0 %v51, 12
  %v1649 = vpop.permute.xlu0 %1648
  %1650 = vrot.lane.b32.xlu0 %v52, 12
  %v1651 = vpop.permute.xlu0 %1650
  %1652 = vrot.lane.b32.xlu0 %v53, 12
  %v1653 = vpop.permute.xlu0 %1652
  %1654 = vrot.lane.b32.xlu0 %v54, 12
  %v1655 = vpop.permute.xlu0 %1654
  %1656 = vrot.lane.b32.xlu0 %v55, 12
  %v1657 = vpop.permute.xlu0 %1656
  %1658 = vrot.lane.b32.xlu0 %v56, 12
  %v1659 = vpop.permute.xlu0 %1658
  %1660 = vrot.lane.b32.xlu0 %v57, 12
  %v1661 = vpop.permute.xlu0 %1660
  %1662 = vrot.lane.b32.xlu0 %v58, 12
  %v1663 = vpop.permute.xlu0 %1662
  %1664 = vrot.lane.b32.xlu0 %v59, 12
  %v1665 = vpop.permute.xlu0 %1664
  %1666 = vrot.lane.b32.xlu0 %v60, 12
  %v1667 = vpop.permute.xlu0 %1666
  %1668 = vrot.lane.b32.xlu0 %v61, 12
  %v1669 = vpop.permute.xlu0 %1668
  %1670 = vrot.lane.b32.xlu0 %v62, 12
  %v1671 = vpop.permute.xlu0 %1670
  %v1692 = vmul.f32 %v63, %v1633
  %v1693 = vmul.f32 %v64, %v1635
  %v1694 = vmul.f32 %v65, %v1637
  %v1695 = vmul.f32 %v66, %v1639
  %v1696 = vmul.f32 %v67, %v1641
  %v1697 = vmul.f32 %v68, %v1643
  %v1698 = vmul.f32 %v69, %v1645
  %v1699 = vmul.f32 %v70, %v1647
  %v1700 = vmul.f32 %v71, %v1649
  %v1701 = vmul.f32 %v72, %v1651
  %v1702 = vmul.f32 %v73, %v1653
  %v1703 = vmul.f32 %v74, %v1655
  %v1704 = vmul.f32 %v75, %v1657
  %v1705 = vmul.f32 %v76, %v1659
  %v1706 = vmul.f32 %v77, %v1661
  %v1707 = vmul.f32 %v78, %v1663
  %v1708 = vmul.f32 %v79, %v1665
  %v1709 = vmul.f32 %v80, %v1667
  %v1710 = vmul.f32 %v81, %v1669
  %v1711 = vmul.f32 %v82, %v1671
  %1732 = vrot.lane.b32.xlu0 %v1692, 116
  %v1733 = vpop.permute.xlu0 %1732
  %1734 = vrot.lane.b32.xlu0 %v1693, 116
  %v1735 = vpop.permute.xlu0 %1734
  %1736 = vrot.lane.b32.xlu0 %v1694, 116
  %v1737 = vpop.permute.xlu0 %1736
  %1738 = vrot.lane.b32.xlu0 %v1695, 116
  %v1739 = vpop.permute.xlu0 %1738
  %1740 = vrot.lane.b32.xlu0 %v1696, 116
  %v1741 = vpop.permute.xlu0 %1740
  %1742 = vrot.lane.b32.xlu0 %v1697, 116
  %v1743 = vpop.permute.xlu0 %1742
  %1744 = vrot.lane.b32.xlu0 %v1698, 116
  %v1745 = vpop.permute.xlu0 %1744
  %1746 = vrot.lane.b32.xlu0 %v1699, 116
  %v1747 = vpop.permute.xlu0 %1746
  %1748 = vrot.lane.b32.xlu0 %v1700, 116
  %v1749 = vpop.permute.xlu0 %1748
  %1750 = vrot.lane.b32.xlu0 %v1701, 116
  %v1751 = vpop.permute.xlu0 %1750
  %1752 = vrot.lane.b32.xlu0 %v1702, 116
  %v1753 = vpop.permute.xlu0 %1752
  %1754 = vrot.lane.b32.xlu0 %v1703, 116
  %v1755 = vpop.permute.xlu0 %1754
  %1756 = vrot.lane.b32.xlu0 %v1704, 116
  %v1757 = vpop.permute.xlu0 %1756
  %1758 = vrot.lane.b32.xlu0 %v1705, 116
  %v1759 = vpop.permute.xlu0 %1758
  %1760 = vrot.lane.b32.xlu0 %v1706, 116
  %v1761 = vpop.permute.xlu0 %1760
  %1762 = vrot.lane.b32.xlu0 %v1707, 116
  %v1763 = vpop.permute.xlu0 %1762
  %1764 = vrot.lane.b32.xlu0 %v1708, 116
  %v1765 = vpop.permute.xlu0 %1764
  %1766 = vrot.lane.b32.xlu0 %v1709, 116
  %v1767 = vpop.permute.xlu0 %1766
  %1768 = vrot.lane.b32.xlu0 %v1710, 116
  %v1769 = vpop.permute.xlu0 %1768
  %1770 = vrot.lane.b32.xlu0 %v1711, 116
  %v1771 = vpop.permute.xlu0 %1770
  %v1792 = vsel %vm139, %v1733, 0.0
  %1793 = vadd.xlane.f32.xlu0 %v1792
  %v1794 = vpop.xlane.xlu0 %1793
  %v1795 = vsel %vm139, %v1735, 0.0
  %1796 = vadd.xlane.f32.xlu0 %v1795
  %v1797 = vpop.xlane.xlu0 %1796
  %v1798 = vsel %vm139, %v1737, 0.0
  %1799 = vadd.xlane.f32.xlu0 %v1798
  %v1800 = vpop.xlane.xlu0 %1799
  %v1801 = vsel %vm139, %v1739, 0.0
  %1802 = vadd.xlane.f32.xlu0 %v1801
  %v1803 = vpop.xlane.xlu0 %1802
  %v1804 = vsel %vm139, %v1741, 0.0
  %1805 = vadd.xlane.f32.xlu0 %v1804
  %v1806 = vpop.xlane.xlu0 %1805
  %v1807 = vsel %vm139, %v1743, 0.0
  %1808 = vadd.xlane.f32.xlu0 %v1807
  %v1809 = vpop.xlane.xlu0 %1808
  %v1810 = vsel %vm139, %v1745, 0.0
  %1811 = vadd.xlane.f32.xlu0 %v1810
  %v1812 = vpop.xlane.xlu0 %1811
  %v1813 = vsel %vm139, %v1747, 0.0
  %1814 = vadd.xlane.f32.xlu0 %v1813
  %v1815 = vpop.xlane.xlu0 %1814
  %v1816 = vsel %vm139, %v1749, 0.0
  %1817 = vadd.xlane.f32.xlu0 %v1816
  %v1818 = vpop.xlane.xlu0 %1817
  %v1819 = vsel %vm139, %v1751, 0.0
  %1820 = vadd.xlane.f32.xlu0 %v1819
  %v1821 = vpop.xlane.xlu0 %1820
  %v1822 = vsel %vm139, %v1753, 0.0
  %1823 = vadd.xlane.f32.xlu0 %v1822
  %v1824 = vpop.xlane.xlu0 %1823
  %v1825 = vsel %vm139, %v1755, 0.0
  %1826 = vadd.xlane.f32.xlu0 %v1825
  %v1827 = vpop.xlane.xlu0 %1826
  %v1828 = vsel %vm139, %v1757, 0.0
  %1829 = vadd.xlane.f32.xlu0 %v1828
  %v1830 = vpop.xlane.xlu0 %1829
  %v1831 = vsel %vm139, %v1759, 0.0
  %1832 = vadd.xlane.f32.xlu0 %v1831
  %v1833 = vpop.xlane.xlu0 %1832
  %v1834 = vsel %vm139, %v1761, 0.0
  %1835 = vadd.xlane.f32.xlu0 %v1834
  %v1836 = vpop.xlane.xlu0 %1835
  %v1837 = vsel %vm139, %v1763, 0.0
  %1838 = vadd.xlane.f32.xlu0 %v1837
  %v1839 = vpop.xlane.xlu0 %1838
  %v1840 = vsel %vm139, %v1765, 0.0
  %1841 = vadd.xlane.f32.xlu0 %v1840
  %v1842 = vpop.xlane.xlu0 %1841
  %v1843 = vsel %vm139, %v1767, 0.0
  %1844 = vadd.xlane.f32.xlu0 %v1843
  %v1845 = vpop.xlane.xlu0 %1844
  %v1846 = vsel %vm139, %v1769, 0.0
  %1847 = vadd.xlane.f32.xlu0 %v1846
  %v1848 = vpop.xlane.xlu0 %1847
  %v1849 = vsel %vm139, %v1771, 0.0
  %1850 = vadd.xlane.f32.xlu0 %v1849
  %v1851 = vpop.xlane.xlu0 %1850
  %v1852 = vmul.f32 %v1794, %v204
  %v1853 = vmul.f32 %v1797, %v204
  %v1854 = vmul.f32 %v1800, %v204
  %v1855 = vmul.f32 %v1803, %v204
  %v1856 = vmul.f32 %v1806, %v204
  %v1857 = vmul.f32 %v1809, %v204
  %v1858 = vmul.f32 %v1812, %v204
  %v1859 = vmul.f32 %v1815, %v204
  %v1860 = vmul.f32 %v1818, %v204
  %v1861 = vmul.f32 %v1821, %v204
  %v1862 = vmul.f32 %v1824, %v204
  %v1863 = vmul.f32 %v1827, %v204
  %v1864 = vmul.f32 %v1830, %v204
  %v1865 = vmul.f32 %v1833, %v204
  %v1866 = vmul.f32 %v1836, %v204
  %v1867 = vmul.f32 %v1839, %v204
  %v1868 = vmul.f32 %v1842, %v204
  %v1869 = vmul.f32 %v1845, %v204
  %v1870 = vmul.f32 %v1848, %v204
  %v1871 = vmul.f32 %v1851, %v204
  %v1872 = vadd.f32 %v1852, %v230
  %v1873 = vadd.f32 %v1853, %v230
  %v1874 = vadd.f32 %v1854, %v230
  %v1875 = vadd.f32 %v1855, %v230
  %v1876 = vadd.f32 %v1856, %v230
  %v1877 = vadd.f32 %v1857, %v230
  %v1878 = vadd.f32 %v1858, %v230
  %v1879 = vadd.f32 %v1859, %v230
  %v1880 = vadd.f32 %v1860, %v230
  %v1881 = vadd.f32 %v1861, %v230
  %v1882 = vadd.f32 %v1862, %v230
  %v1883 = vadd.f32 %v1863, %v230
  %v1884 = vadd.f32 %v1864, %v230
  %v1885 = vadd.f32 %v1865, %v230
  %v1886 = vadd.f32 %v1866, %v230
  %v1887 = vadd.f32 %v1867, %v230
  %v1888 = vadd.f32 %v1868, %v230
  %v1889 = vadd.f32 %v1869, %v230
  %v1890 = vadd.f32 %v1870, %v230
  %v1891 = vadd.f32 %v1871, %v230
  %v1892 = vpack.c.bf16 %v1873, %v1872
  %v1893 = vpack.c.bf16 %v1875, %v1874
  %v1894 = vpack.c.bf16 %v1877, %v1876
  %v1895 = vpack.c.bf16 %v1879, %v1878
  %v1896 = vpack.c.bf16 %v1881, %v1880
  %v1897 = vpack.c.bf16 %v1883, %v1882
  %v1898 = vpack.c.bf16 %v1885, %v1884
  %v1899 = vpack.c.bf16 %v1887, %v1886
  %v1900 = vpack.c.bf16 %v1889, %v1888
  %v1901 = vpack.c.bf16 %v1891, %v1890
  %v1903 = vsel %vm262, %v1892, 0
  %v1906 = vsel %vm262, %v1893, 0
  %v1909 = vsel %vm262, %v1894, 0
  %v1912 = vsel %vm262, %v1895, 0
  %v1915 = vsel %vm262, %v1896, 0
  %v1918 = vsel %vm262, %v1897, 0
  %v1921 = vsel %vm262, %v1898, 0
  %v1924 = vsel %vm262, %v1899, 0
  %v1927 = vsel %vm262, %v1900, 0
  %v1930 = vsel %vm262, %v1901, 0
  %1932 = vmatprep.subr.bf16.mxu0 0
  %1933 = vmatpush1.bf16.msra.mxu0 %v109
  %1934 = vmatprep.subr.bf16.mxu0 0
  %1935 = vmatpush1.bf16.msra.mxu0 %v110
  %1936 = vmatprep.subr.bf16.mxu0 0
  %1937 = vmatpush1.bf16.msra.mxu0 0
  %1938 = vmatprep.subr.bf16.mxu0 0
  %1939 = vmatpush1.bf16.msra.mxu0 0
  %1940 = vmatprep.subr.bf16.mxu0 0
  %1941 = vmatpush1.bf16.msra.mxu0 0
  %1942 = vmatprep.subr.bf16.mxu0 0
  %1943 = vmatpush1.bf16.msra.mxu0 0
  %1944 = vmatprep.subr.bf16.mxu0 0
  %1945 = vmatpush1.bf16.msra.mxu0 0
  %1946 = vmatprep.subr.bf16.mxu0 0
  %1947 = vmatpush1.bf16.msra.mxu0 0
  %1948 = vmatprep.subr.bf16.mxu0 0
  %1949 = vmatpush1.bf16.msra.mxu0 0
  %1950 = vmatprep.subr.bf16.mxu0 0
  %1951 = vmatpush1.bf16.msra.mxu0 0
  %1952 = vmatprep.subr.bf16.mxu0 0
  %1953 = vmatpush1.bf16.msra.mxu0 0
  %1954 = vmatprep.subr.bf16.mxu0 0
  %1955 = vmatpush1.bf16.msra.mxu0 0
  %1956 = vmatprep.subr.bf16.mxu0 0
  %1957 = vmatpush1.bf16.msra.mxu0 0
  %1958 = vmatprep.subr.bf16.mxu0 0
  %1959 = vmatpush1.bf16.msra.mxu0 0
  %1960 = vmatprep.subr.bf16.mxu0 0
  %1961 = vmatpush1.bf16.msra.mxu0 0
  %1962 = vmatprep.subr.bf16.mxu0 0
  %1963 = vmatpush1.bf16.msra.mxu0 0
  %1964 = vmatprep.mubr.bf16.mxu0 0
  %1965 = vmatmul.mubr.bf16.gmra.mrb[0].mxu0 %v1903
  %v1966 = vpop.f32.mrb[0].mxu0
  %v1967 = vadd.f32 0.0, %v1966
  %v1968 = vpop.f32.mrb[0].mxu0
  %v1969 = vpop.f32.mrb[0].mxu0
  %v1970 = vadd.f32 0.0, %v1969
  %v1971 = vpop.f32.mrb[0].mxu0
  %1972 = vmatprep.mubr.bf16.mxu0 0
  %1973 = vmatmul.mubr.bf16.gmra.mrb[0].mxu0 %v1906
  %v1974 = vpop.f32.mrb[0].mxu0
  %v1975 = vadd.f32 0.0, %v1974
  %v1976 = vpop.f32.mrb[0].mxu0
  %v1977 = vpop.f32.mrb[0].mxu0
  %v1978 = vadd.f32 0.0, %v1977
  %v1979 = vpop.f32.mrb[0].mxu0
  %1980 = vmatprep.mubr.bf16.mxu0 0
  %1981 = vmatmul.mubr.bf16.gmra.mrb[0].mxu0 %v1909
  %v1982 = vpop.f32.mrb[0].mxu0
  %v1983 = vadd.f32 0.0, %v1982
  %v1984 = vpop.f32.mrb[0].mxu0
  %v1985 = vpop.f32.mrb[0].mxu0
  %v1986 = vadd.f32 0.0, %v1985
  %v1987 = vpop.f32.mrb[0].mxu0
  %1988 = vmatprep.mubr.bf16.mxu0 0
  %1989 = vmatmul.mubr.bf16.gmra.mrb[0].mxu0 %v1912
  %v1990 = vpop.f32.mrb[0].mxu0
  %v1991 = vadd.f32 0.0, %v1990
  %v1992 = vpop.f32.mrb[0].mxu0
  %v1993 = vpop.f32.mrb[0].mxu0
  %v1994 = vadd.f32 0.0, %v1993
  %v1995 = vpop.f32.mrb[0].mxu0
  %1996 = vmatprep.mubr.bf16.mxu0 0
  %1997 = vmatmul.mubr.bf16.gmra.mrb[0].mxu0 %v1915
  %v1998 = vpop.f32.mrb[0].mxu0
  %v1999 = vadd.f32 0.0, %v1998
  %v2000 = vpop.f32.mrb[0].mxu0
  %v2001 = vpop.f32.mrb[0].mxu0
  %v2002 = vadd.f32 0.0, %v2001
  %v2003 = vpop.f32.mrb[0].mxu0
  %2004 = vmatprep.mubr.bf16.mxu0 0
  %2005 = vmatmul.mubr.bf16.gmra.mrb[0].mxu0 %v1918
  %v2006 = vpop.f32.mrb[0].mxu0
  %v2007 = vadd.f32 0.0, %v2006
  %v2008 = vpop.f32.mrb[0].mxu0
  %v2009 = vpop.f32.mrb[0].mxu0
  %v2010 = vadd.f32 0.0, %v2009
  %v2011 = vpop.f32.mrb[0].mxu0
  %2012 = vmatprep.mubr.bf16.mxu0 0
  %2013 = vmatmul.mubr.bf16.gmra.mrb[0].mxu0 %v1921
  %v2014 = vpop.f32.mrb[0].mxu0
  %v2015 = vadd.f32 0.0, %v2014
  %v2016 = vpop.f32.mrb[0].mxu0
  %v2017 = vpop.f32.mrb[0].mxu0
  %v2018 = vadd.f32 0.0, %v2017
  %v2019 = vpop.f32.mrb[0].mxu0
  %2020 = vmatprep.mubr.bf16.mxu0 0
  %2021 = vmatmul.mubr.bf16.gmra.mrb[0].mxu0 %v1924
  %v2022 = vpop.f32.mrb[0].mxu0
  %v2023 = vadd.f32 0.0, %v2022
  %v2024 = vpop.f32.mrb[0].mxu0
  %v2025 = vpop.f32.mrb[0].mxu0
  %v2026 = vadd.f32 0.0, %v2025
  %v2027 = vpop.f32.mrb[0].mxu0
  %2028 = vmatprep.mubr.bf16.mxu0 0
  %2029 = vmatmul.mubr.bf16.gmra.mrb[0].mxu0 %v1927
  %v2030 = vpop.f32.mrb[0].mxu0
  %v2031 = vadd.f32 0.0, %v2030
  %v2032 = vpop.f32.mrb[0].mxu0
  %v2033 = vpop.f32.mrb[0].mxu0
  %v2034 = vadd.f32 0.0, %v2033
  %v2035 = vpop.f32.mrb[0].mxu0
  %2036 = vmatprep.mubr.bf16.mxu0 0
  %2037 = vmatmul.mubr.bf16.gmra.mrb[0].mxu0 %v1930
  %v2038 = vpop.f32.mrb[0].mxu0
  %v2039 = vadd.f32 0.0, %v2038
  %v2040 = vpop.f32.mrb[0].mxu0
  %v2041 = vpop.f32.mrb[0].mxu0
  %v2042 = vadd.f32 0.0, %v2041
  %v2043 = vpop.f32.mrb[0].mxu0
  %2044 = vdwg.mxu0
  %2045 = vset.pattern.permute.xlu0 3
  %2046 = vperm.xlu0 %2045, %v83
  %v2047 = vpop.permute.xlu0 %2046
  %2049 = vset.pattern.permute.xlu0 3
  %2050 = vperm.xlu0 %2049, %v84
  %v2051 = vpop.permute.xlu0 %2050
  %2053 = vset.pattern.permute.xlu0 3
  %2054 = vperm.xlu0 %2053, %v85
  %v2055 = vpop.permute.xlu0 %2054
  %2057 = vset.pattern.permute.xlu0 3
  %2058 = vperm.xlu0 %2057, %v86
  %v2059 = vpop.permute.xlu0 %2058
  %2061 = vset.pattern.permute.xlu0 3
  %2062 = vperm.xlu0 %2061, %v87
  %v2063 = vpop.permute.xlu0 %2062
  %2065 = vset.pattern.permute.xlu0 3
  %2066 = vperm.xlu0 %2065, %v88
  %v2067 = vpop.permute.xlu0 %2066
  %2069 = vset.pattern.permute.xlu0 3
  %2070 = vperm.xlu0 %2069, %v89
  %v2071 = vpop.permute.xlu0 %2070
  %2073 = vset.pattern.permute.xlu0 3
  %2074 = vperm.xlu0 %2073, %v90
  %v2075 = vpop.permute.xlu0 %2074
  %2077 = vset.pattern.permute.xlu0 3
  %2078 = vperm.xlu0 %2077, %v91
  %v2079 = vpop.permute.xlu0 %2078
  %2081 = vset.pattern.permute.xlu0 3
  %2082 = vperm.xlu0 %2081, %v92
  %v2083 = vpop.permute.xlu0 %2082
  %2085 = vset.pattern.permute.xlu0 3
  %2086 = vperm.xlu0 %2085, %v93
  %v2087 = vpop.permute.xlu0 %2086
  %2089 = vset.pattern.permute.xlu0 3
  %2090 = vperm.xlu0 %2089, %v94
  %v2091 = vpop.permute.xlu0 %2090
  %2093 = vset.pattern.permute.xlu0 3
  %2094 = vperm.xlu0 %2093, %v95
  %v2095 = vpop.permute.xlu0 %2094
  %2097 = vset.pattern.permute.xlu0 3
  %2098 = vperm.xlu0 %2097, %v96
  %v2099 = vpop.permute.xlu0 %2098
  %2101 = vset.pattern.permute.xlu0 3
  %2102 = vperm.xlu0 %2101, %v97
  %v2103 = vpop.permute.xlu0 %2102
  %2105 = vset.pattern.permute.xlu0 3
  %2106 = vperm.xlu0 %2105, %v98
  %v2107 = vpop.permute.xlu0 %2106
  %2109 = vset.pattern.permute.xlu0 3
  %2110 = vperm.xlu0 %2109, %v99
  %v2111 = vpop.permute.xlu0 %2110
  %2113 = vset.pattern.permute.xlu0 3
  %2114 = vperm.xlu0 %2113, %v100
  %v2115 = vpop.permute.xlu0 %2114
  %2117 = vset.pattern.permute.xlu0 3
  %2118 = vperm.xlu0 %2117, %v101
  %v2119 = vpop.permute.xlu0 %2118
  %2121 = vset.pattern.permute.xlu0 3
  %2122 = vperm.xlu0 %2121, %v102
  %v2123 = vpop.permute.xlu0 %2122
  %v2125 = vmul.f32 %v2047, %v1967
  %v2126 = vmul.f32 %v2051, %v1970
  %v2127 = vmul.f32 %v2055, %v1975
  %v2128 = vmul.f32 %v2059, %v1978
  %v2129 = vmul.f32 %v2063, %v1983
  %v2130 = vmul.f32 %v2067, %v1986
  %v2131 = vmul.f32 %v2071, %v1991
  %v2132 = vmul.f32 %v2075, %v1994
  %v2133 = vmul.f32 %v2079, %v1999
  %v2134 = vmul.f32 %v2083, %v2002
  %v2135 = vmul.f32 %v2087, %v2007
  %v2136 = vmul.f32 %v2091, %v2010
  %v2137 = vmul.f32 %v2095, %v2015
  %v2138 = vmul.f32 %v2099, %v2018
  %v2139 = vmul.f32 %v2103, %v2023
  %v2140 = vmul.f32 %v2107, %v2026
  %v2141 = vmul.f32 %v2111, %v2031
  %v2142 = vmul.f32 %v2115, %v2034
  %v2143 = vmul.f32 %v2119, %v2039
  %v2144 = vmul.f32 %v2123, %v2042
  %v2145 = vadd.f32 %v1612, %v2125
  %v2146 = vadd.f32 %v1613, %v2126
  %v2147 = vadd.f32 %v1614, %v2127
  %v2148 = vadd.f32 %v1615, %v2128
  %v2149 = vadd.f32 %v1616, %v2129
  %v2150 = vadd.f32 %v1617, %v2130
  %v2151 = vadd.f32 %v1618, %v2131
  %v2152 = vadd.f32 %v1619, %v2132
  %v2153 = vadd.f32 %v1620, %v2133
  %v2154 = vadd.f32 %v1621, %v2134
  %v2155 = vadd.f32 %v1622, %v2135
  %v2156 = vadd.f32 %v1623, %v2136
  %v2157 = vadd.f32 %v1624, %v2137
  %v2158 = vadd.f32 %v1625, %v2138
  %v2159 = vadd.f32 %v1626, %v2139
  %v2160 = vadd.f32 %v1627, %v2140
  %v2161 = vadd.f32 %v1628, %v2141
  %v2162 = vadd.f32 %v1629, %v2142
  %v2163 = vadd.f32 %v1630, %v2143
  %v2164 = vadd.f32 %v1631, %v2144
  %v2165 = vpack.c.bf16 %v2146, %v2145
  %v2166 = vpack.c.bf16 %v2148, %v2147
  %v2167 = vpack.c.bf16 %v2150, %v2149
  %v2168 = vpack.c.bf16 %v2152, %v2151
  %v2169 = vpack.c.bf16 %v2154, %v2153
  %v2170 = vpack.c.bf16 %v2156, %v2155
  %v2171 = vpack.c.bf16 %v2158, %v2157
  %v2172 = vpack.c.bf16 %v2160, %v2159
  %v2173 = vpack.c.bf16 %v2162, %v2161
  %v2174 = vpack.c.bf16 %v2164, %v2163
  %v2175 = vld [vmem:[%s7] sm:$0xff]
  %v2176 = vld [vmem:[%s7 + $0x8] sm:$0xff]
  %v2177 = vld [vmem:[%s7 + $0x10] sm:$0xff]
  %v2178 = vld [vmem:[%s7 + $0x18] sm:$0xff]
  %v2179 = vpack.c.bf16 %v2176, %v2175
  %v2180 = vpack.c.bf16 %v2178, %v2177
  %v2181 = vld [vmem:[%s9] sm:$0x1]
  %v2183 = vlaneseq
  %v2184 = vshrl.u32 %v2183, 7
  %v2185 = vsub.s32 0, %v2184
  %v2186 = vrot.slane %v2181, %v2185
  %v2189 = vsel %vm262, %v2165, 0
  %v2192 = vsel %vm262, %v2166, 0
  %v2195 = vsel %vm262, %v2167, 0
  %v2198 = vsel %vm262, %v2168, 0
  %v2201 = vsel %vm262, %v2169, 0
  %v2204 = vsel %vm262, %v2170, 0
  %v2207 = vsel %vm262, %v2171, 0
  %v2210 = vsel %vm262, %v2172, 0
  %v2213 = vsel %vm262, %v2173, 0
  %v2216 = vsel %vm262, %v2174, 0
  %2218 = vmatprep.subr.bf16.mxu0 0
  %2219 = vmatpush1.bf16.msra.mxu0 %v2179
  %2220 = vmatprep.subr.bf16.mxu0 0
  %2221 = vmatpush1.bf16.msra.mxu0 %v2180
  %2222 = vmatprep.subr.bf16.mxu0 0
  %2223 = vmatpush1.bf16.msra.mxu0 0
  %2224 = vmatprep.subr.bf16.mxu0 0
  %2225 = vmatpush1.bf16.msra.mxu0 0
  %2226 = vmatprep.subr.bf16.mxu0 0
  %2227 = vmatpush1.bf16.msra.mxu0 0
  %2228 = vmatprep.subr.bf16.mxu0 0
  %2229 = vmatpush1.bf16.msra.mxu0 0
  %2230 = vmatprep.subr.bf16.mxu0 0
  %2231 = vmatpush1.bf16.msra.mxu0 0
  %2232 = vmatprep.subr.bf16.mxu0 0
  %2233 = vmatpush1.bf16.msra.mxu0 0
  %2234 = vmatprep.subr.bf16.mxu0 0
  %2235 = vmatpush1.bf16.msra.mxu0 0
  %2236 = vmatprep.subr.bf16.mxu0 0
  %2237 = vmatpush1.bf16.msra.mxu0 0
  %2238 = vmatprep.subr.bf16.mxu0 0
  %2239 = vmatpush1.bf16.msra.mxu0 0
  %2240 = vmatprep.subr.bf16.mxu0 0
  %2241 = vmatpush1.bf16.msra.mxu0 0
  %2242 = vmatprep.subr.bf16.mxu0 0
  %2243 = vmatpush1.bf16.msra.mxu0 0
  %2244 = vmatprep.subr.bf16.mxu0 0
  %2245 = vmatpush1.bf16.msra.mxu0 0
  %2246 = vmatprep.subr.bf16.mxu0 0
  %2247 = vmatpush1.bf16.msra.mxu0 0
  %2248 = vmatprep.subr.bf16.mxu0 0
  %2249 = vmatpush1.bf16.msra.mxu0 0
  %2250 = vmatprep.mubr.bf16.mxu0 0
  %2251 = vmatmul.mubr.bf16.gmra.mrb[0].mxu0 %v2189
  %v2252 = vpop.f32.mrb[0].mxu0
  %v2253 = vadd.f32 %v2186, %v2252
  %v2254 = vpop.f32.mrb[0].mxu0
  %v2255 = vpop.f32.mrb[0].mxu0
  %v2256 = vadd.f32 %v2186, %v2255
  %v2257 = vpop.f32.mrb[0].mxu0
  %2258 = vmatprep.mubr.bf16.mxu0 0
  %2259 = vmatmul.mubr.bf16.gmra.mrb[0].mxu0 %v2192
  %v2260 = vpop.f32.mrb[0].mxu0
  %v2261 = vadd.f32 %v2186, %v2260
  %v2262 = vpop.f32.mrb[0].mxu0
  %v2263 = vpop.f32.mrb[0].mxu0
  %v2264 = vadd.f32 %v2186, %v2263
  %v2265 = vpop.f32.mrb[0].mxu0
  %2266 = vmatprep.mubr.bf16.mxu0 0
  %2267 = vmatmul.mubr.bf16.gmra.mrb[0].mxu0 %v2195
  %v2268 = vpop.f32.mrb[0].mxu0
  %v2269 = vadd.f32 %v2186, %v2268
  %v2270 = vpop.f32.mrb[0].mxu0
  %v2271 = vpop.f32.mrb[0].mxu0
  %v2272 = vadd.f32 %v2186, %v2271
  %v2273 = vpop.f32.mrb[0].mxu0
  %2274 = vmatprep.mubr.bf16.mxu0 0
  %2275 = vmatmul.mubr.bf16.gmra.mrb[0].mxu0 %v2198
  %v2276 = vpop.f32.mrb[0].mxu0
  %v2277 = vadd.f32 %v2186, %v2276
  %v2278 = vpop.f32.mrb[0].mxu0
  %v2279 = vpop.f32.mrb[0].mxu0
  %v2280 = vadd.f32 %v2186, %v2279
  %v2281 = vpop.f32.mrb[0].mxu0
  %2282 = vmatprep.mubr.bf16.mxu0 0
  %2283 = vmatmul.mubr.bf16.gmra.mrb[0].mxu0 %v2201
  %v2284 = vpop.f32.mrb[0].mxu0
  %v2285 = vadd.f32 %v2186, %v2284
  %v2286 = vpop.f32.mrb[0].mxu0
  %v2287 = vpop.f32.mrb[0].mxu0
  %v2288 = vadd.f32 %v2186, %v2287
  %v2289 = vpop.f32.mrb[0].mxu0
  %2290 = vmatprep.mubr.bf16.mxu0 0
  %2291 = vmatmul.mubr.bf16.gmra.mrb[0].mxu0 %v2204
  %v2292 = vpop.f32.mrb[0].mxu0
  %v2293 = vadd.f32 %v2186, %v2292
  %v2294 = vpop.f32.mrb[0].mxu0
  %v2295 = vpop.f32.mrb[0].mxu0
  %v2296 = vadd.f32 %v2186, %v2295
  %v2297 = vpop.f32.mrb[0].mxu0
  %2298 = vmatprep.mubr.bf16.mxu0 0
  %2299 = vmatmul.mubr.bf16.gmra.mrb[0].mxu0 %v2207
  %v2300 = vpop.f32.mrb[0].mxu0
  %v2301 = vadd.f32 %v2186, %v2300
  %v2302 = vpop.f32.mrb[0].mxu0
  %v2303 = vpop.f32.mrb[0].mxu0
  %v2304 = vadd.f32 %v2186, %v2303
  %v2305 = vpop.f32.mrb[0].mxu0
  %2306 = vmatprep.mubr.bf16.mxu0 0
  %2307 = vmatmul.mubr.bf16.gmra.mrb[0].mxu0 %v2210
  %v2308 = vpop.f32.mrb[0].mxu0
  %v2309 = vadd.f32 %v2186, %v2308
  %v2310 = vpop.f32.mrb[0].mxu0
  %v2311 = vpop.f32.mrb[0].mxu0
  %v2312 = vadd.f32 %v2186, %v2311
  %v2313 = vpop.f32.mrb[0].mxu0
  %2314 = vmatprep.mubr.bf16.mxu0 0
  %2315 = vmatmul.mubr.bf16.gmra.mrb[0].mxu0 %v2213
  %v2316 = vpop.f32.mrb[0].mxu0
  %v2317 = vadd.f32 %v2186, %v2316
  %v2318 = vpop.f32.mrb[0].mxu0
  %v2319 = vpop.f32.mrb[0].mxu0
  %v2320 = vadd.f32 %v2186, %v2319
  %v2321 = vpop.f32.mrb[0].mxu0
  %2322 = vmatprep.mubr.bf16.mxu0 0
  %2323 = vmatmul.mubr.bf16.gmra.mrb[0].mxu0 %v2216
  %v2324 = vpop.f32.mrb[0].mxu0
  %v2325 = vadd.f32 %v2186, %v2324
  %v2326 = vpop.f32.mrb[0].mxu0
  %v2327 = vpop.f32.mrb[0].mxu0
  %v2328 = vadd.f32 %v2186, %v2327
  %v2329 = vpop.f32.mrb[0].mxu0
  %2330 = vdwg.mxu0
  %v2331 = vld [vmem:[%s8] sm:$0xff]
  %v2332 = vld [vmem:[%s8 + $0x8] sm:$0xff]
  %v2333 = vld [vmem:[%s8 + $0x10] sm:$0xff]
  %v2334 = vld [vmem:[%s8 + $0x18] sm:$0xff]
  %v2335 = vpack.c.bf16 %v2332, %v2331
  %v2336 = vpack.c.bf16 %v2334, %v2333
  %v2337 = vlaneseq
  %v2338 = vand.u32 %v2337, 127
  %vm2339 = vcmp.ge.s32.totalorder %v2338, 64
  %vm2340 = vcmp.lt.s32.totalorder %v2338, 96
  %vm2341 = vmand %vm2339, %vm2340
  %v2343 = vsel %vm262, 0, 0
  %2345 = vmatprep.subr.bf16.mxu0 0
  %2346 = vmatpush1.bf16.msra.mxu0 %v2335
  %2347 = vmatprep.subr.bf16.mxu0 0
  %2348 = vmatpush1.bf16.msra.mxu0 %v2336
  %2349 = vmatprep.subr.bf16.mxu0 0
  %2350 = vmatpush1.bf16.msra.mxu0 0
  %2351 = vmatprep.subr.bf16.mxu0 0
  %2352 = vmatpush1.bf16.msra.mxu0 0
  %2353 = vmatprep.subr.bf16.mxu0 0
  %2354 = vmatpush1.bf16.msra.mxu0 0
  %2355 = vmatprep.subr.bf16.mxu0 0
  %2356 = vmatpush1.bf16.msra.mxu0 0
  %2357 = vmatprep.subr.bf16.mxu0 0
  %2358 = vmatpush1.bf16.msra.mxu0 0
  %2359 = vmatprep.subr.bf16.mxu0 0
  %2360 = vmatpush1.bf16.msra.mxu0 0
  %2361 = vmatprep.subr.bf16.mxu0 0
  %2362 = vmatpush1.bf16.msra.mxu0 0
  %2363 = vmatprep.subr.bf16.mxu0 0
  %2364 = vmatpush1.bf16.msra.mxu0 0
  %2365 = vmatprep.subr.bf16.mxu0 0
  %2366 = vmatpush1.bf16.msra.mxu0 0
  %2367 = vmatprep.subr.bf16.mxu0 0
  %2368 = vmatpush1.bf16.msra.mxu0 0
  %2369 = vmatprep.subr.bf16.mxu0 0
  %2370 = vmatpush1.bf16.msra.mxu0 0
  %2371 = vmatprep.subr.bf16.mxu0 0
  %2372 = vmatpush1.bf16.msra.mxu0 0
  %2373 = vmatprep.subr.bf16.mxu0 0
  %2374 = vmatpush1.bf16.msra.mxu0 0
  %2375 = vmatprep.subr.bf16.mxu0 0
  %2376 = vmatpush1.bf16.msra.mxu0 0
  %2377 = vmatprep.mubr.bf16.mxu0 0
  %2378 = vmatmul.mubr.bf16.gmra.mrb[0].mxu0 %v2343
  %v2379 = vpop.f32.mrb[0].mxu0
  %v2380 = vadd.f32 0.0, %v2379
  %v2381 = vpop.f32.mrb[0].mxu0
  %v2382 = vpop.f32.mrb[0].mxu0
  %v2383 = vadd.f32 0.0, %v2382
  %v2384 = vpop.f32.mrb[0].mxu0
  %2385 = vmatprep.mubr.bf16.mxu0 0
  %2386 = vmatmul.mubr.bf16.gmra.mrb[0].mxu0 %v2343
  %v2387 = vpop.f32.mrb[0].mxu0
  %v2388 = vadd.f32 0.0, %v2387
  %v2389 = vpop.f32.mrb[0].mxu0
  %v2390 = vpop.f32.mrb[0].mxu0
  %v2391 = vadd.f32 0.0, %v2390
  %v2392 = vpop.f32.mrb[0].mxu0
  %2393 = vdwg.mxu0
  %v2394 = vadd.f32 %v2253, %v2380
  %v2395 = vadd.f32 %v2256, %v2383
  %v2396 = vadd.f32 %v2261, %v2388
  %v2397 = vadd.f32 %v2264, %v2391
  %v2398 = vtanh.pop %v2394
  %v2399 = vtanh.pop %v2395
  %v2400 = vtanh.pop %v2396
  %v2401 = vtanh.pop %v2397
  %v2402 = vxor.u32 %v2394, 2147483648
  %v2403 = vxor.u32 %v2395, 2147483648
  %v2404 = vxor.u32 %v2396, 2147483648
  %v2405 = vxor.u32 %v2397, 2147483648
  %v2406 = vmul.f32 %v2402, 1.442695
  %v2407 = vpow.pop %v2406
  %v2408 = vmul.f32 %v2403, 1.442695
  %v2409 = vpow.pop %v2408
  %v2410 = vmul.f32 %v2404, 1.442695
  %v2411 = vpow.pop %v2410
  %v2412 = vmul.f32 %v2405, 1.442695
  %v2413 = vpow.pop %v2412
  %v2414 = vadd.f32 %v2407, 1.0
  %v2415 = vadd.f32 %v2409, 1.0
  %v2416 = vadd.f32 %v2411, 1.0
  %v2417 = vadd.f32 %v2413, 1.0
  %v2418 = vrcp.pop %v2414
  %v2419 = vmul.f32 1.0, %v2418
  %v2420 = vrcp.pop %v2415
  %v2421 = vmul.f32 1.0, %v2420
  %v2422 = vrcp.pop %v2416
  %v2423 = vmul.f32 1.0, %v2422
  %v2424 = vrcp.pop %v2417
  %v2425 = vmul.f32 1.0, %v2424
  %v2426 = vsel %vm2341, %v2398, %v2419
  %v2427 = vsel %vm2341, %v2399, %v2421
  %v2428 = vsel %vm2341, %v2400, %v2423
  %v2429 = vsel %vm2341, %v2401, %v2425
  %v2430 = vmul.f32 %v2426, 0.0
  %v2431 = vmul.f32 %v2427, 0.0
  %v2432 = vmul.f32 %v2428, 0.0
  %v2433 = vmul.f32 %v2429, 0.0
  %2438 = vrot.lane.b32.xlu0 %v2426, 64
  %v2439 = vpop.permute.xlu0 %2438
  %2440 = vrot.lane.b32.xlu0 %v2427, 64
  %v2441 = vpop.permute.xlu0 %2440
  %2442 = vrot.lane.b32.xlu0 %v2428, 64
  %v2443 = vpop.permute.xlu0 %2442
  %2444 = vrot.lane.b32.xlu0 %v2429, 64
  %v2445 = vpop.permute.xlu0 %2444
  %v2450 = vmul.f32 %v2426, %v2439
  %v2451 = vmul.f32 %v2427, %v2441
  %v2452 = vmul.f32 %v2428, %v2443
  %v2453 = vmul.f32 %v2429, %v2445
  %2458 = vrot.lane.b32.xlu0 %v2450, 32
  %v2459 = vpop.permute.xlu0 %2458
  %2460 = vrot.lane.b32.xlu0 %v2451, 32
  %v2461 = vpop.permute.xlu0 %2460
  %2462 = vrot.lane.b32.xlu0 %v2452, 32
  %v2463 = vpop.permute.xlu0 %2462
  %2464 = vrot.lane.b32.xlu0 %v2453, 32
  %v2465 = vpop.permute.xlu0 %2464
  %v2470 = vadd.f32 %v2430, %v2459
  %v2471 = vadd.f32 %v2431, %v2461
  %v2472 = vadd.f32 %v2432, %v2463
  %v2473 = vadd.f32 %v2433, %v2465
  %v2474 = vtanh.pop %v2470
  %v2475 = vtanh.pop %v2471
  %v2476 = vtanh.pop %v2472
  %v2477 = vtanh.pop %v2473
  %2482 = vrot.lane.b32.xlu0 %v2474, 64
  %v2483 = vpop.permute.xlu0 %2482
  %2484 = vrot.lane.b32.xlu0 %v2475, 64
  %v2485 = vpop.permute.xlu0 %2484
  %2486 = vrot.lane.b32.xlu0 %v2476, 64
  %v2487 = vpop.permute.xlu0 %2486
  %2488 = vrot.lane.b32.xlu0 %v2477, 64
  %v2489 = vpop.permute.xlu0 %2488
  %v2494 = vmul.f32 %v2426, %v2483
  %v2495 = vmul.f32 %v2427, %v2485
  %v2496 = vmul.f32 %v2428, %v2487
  %v2497 = vmul.f32 %v2429, %v2489
  %v2498 = vpack.c.bf16 %v2495, %v2494
  %v2499 = vpack.c.bf16 %v2497, %v2496
  %2502 = vrot.lane.b32.xlu0 %v2498, 32
  %v2503 = vpop.permute.xlu0 %2502
  %2504 = vrot.lane.b32.xlu0 %v2499, 32
  %v2505 = vpop.permute.xlu0 %2504
  %v2507 = vsel %vm262, %v2503, 0
  %v2510 = vsel %vm262, %v2505, 0
  %2512 = vmatprep.subr.bf16.mxu0 0
  %2513 = vmatpush1.bf16.msra.mxu0 %v2335
  %2514 = vmatprep.subr.bf16.mxu0 0
  %2515 = vmatpush1.bf16.msra.mxu0 %v2336
  %2516 = vmatprep.subr.bf16.mxu0 0
  %2517 = vmatpush1.bf16.msra.mxu0 0
  %2518 = vmatprep.subr.bf16.mxu0 0
  %2519 = vmatpush1.bf16.msra.mxu0 0
  %2520 = vmatprep.subr.bf16.mxu0 0
  %2521 = vmatpush1.bf16.msra.mxu0 0
  %2522 = vmatprep.subr.bf16.mxu0 0
  %2523 = vmatpush1.bf16.msra.mxu0 0
  %2524 = vmatprep.subr.bf16.mxu0 0
  %2525 = vmatpush1.bf16.msra.mxu0 0
  %2526 = vmatprep.subr.bf16.mxu0 0
  %2527 = vmatpush1.bf16.msra.mxu0 0
  %2528 = vmatprep.subr.bf16.mxu0 0
  %2529 = vmatpush1.bf16.msra.mxu0 0
  %2530 = vmatprep.subr.bf16.mxu0 0
  %2531 = vmatpush1.bf16.msra.mxu0 0
  %2532 = vmatprep.subr.bf16.mxu0 0
  %2533 = vmatpush1.bf16.msra.mxu0 0
  %2534 = vmatprep.subr.bf16.mxu0 0
  %2535 = vmatpush1.bf16.msra.mxu0 0
  %2536 = vmatprep.subr.bf16.mxu0 0
  %2537 = vmatpush1.bf16.msra.mxu0 0
  %2538 = vmatprep.subr.bf16.mxu0 0
  %2539 = vmatpush1.bf16.msra.mxu0 0
  %2540 = vmatprep.subr.bf16.mxu0 0
  %2541 = vmatpush1.bf16.msra.mxu0 0
  %2542 = vmatprep.subr.bf16.mxu0 0
  %2543 = vmatpush1.bf16.msra.mxu0 0
  %2544 = vmatprep.mubr.bf16.mxu0 0
  %2545 = vmatmul.mubr.bf16.gmra.mrb[0].mxu0 %v2507
  %v2546 = vpop.f32.mrb[0].mxu0
  %v2547 = vadd.f32 0.0, %v2546
  %v2548 = vpop.f32.mrb[0].mxu0
  %v2549 = vpop.f32.mrb[0].mxu0
  %v2550 = vadd.f32 0.0, %v2549
  %v2551 = vpop.f32.mrb[0].mxu0
  %2552 = vmatprep.mubr.bf16.mxu0 0
  %2553 = vmatmul.mubr.bf16.gmra.mrb[0].mxu0 %v2510
  %v2554 = vpop.f32.mrb[0].mxu0
  %v2555 = vadd.f32 0.0, %v2554
  %v2556 = vpop.f32.mrb[0].mxu0
  %v2557 = vpop.f32.mrb[0].mxu0
  %v2558 = vadd.f32 0.0, %v2557
  %v2559 = vpop.f32.mrb[0].mxu0
  %2560 = vdwg.mxu0
  %v2561 = vadd.f32 %v2269, %v2547
  %v2562 = vadd.f32 %v2272, %v2550
  %v2563 = vadd.f32 %v2277, %v2555
  %v2564 = vadd.f32 %v2280, %v2558
  %v2565 = vtanh.pop %v2561
  %v2566 = vtanh.pop %v2562
  %v2567 = vtanh.pop %v2563
  %v2568 = vtanh.pop %v2564
  %v2569 = vxor.u32 %v2561, 2147483648
  %v2570 = vxor.u32 %v2562, 2147483648
  %v2571 = vxor.u32 %v2563, 2147483648
  %v2572 = vxor.u32 %v2564, 2147483648
  %v2573 = vmul.f32 %v2569, 1.442695
  %v2574 = vpow.pop %v2573
  %v2575 = vmul.f32 %v2570, 1.442695
  %v2576 = vpow.pop %v2575
  %v2577 = vmul.f32 %v2571, 1.442695
  %v2578 = vpow.pop %v2577
  %v2579 = vmul.f32 %v2572, 1.442695
  %v2580 = vpow.pop %v2579
  %v2581 = vadd.f32 %v2574, 1.0
  %v2582 = vadd.f32 %v2576, 1.0
  %v2583 = vadd.f32 %v2578, 1.0
  %v2584 = vadd.f32 %v2580, 1.0
  %v2585 = vrcp.pop %v2581
  %v2586 = vmul.f32 1.0, %v2585
  %v2587 = vrcp.pop %v2582
  %v2588 = vmul.f32 1.0, %v2587
  %v2589 = vrcp.pop %v2583
  %v2590 = vmul.f32 1.0, %v2589
  %v2591 = vrcp.pop %v2584
  %v2592 = vmul.f32 1.0, %v2591
  %v2593 = vsel %vm2341, %v2565, %v2586
  %v2594 = vsel %vm2341, %v2566, %v2588
  %v2595 = vsel %vm2341, %v2567, %v2590
  %v2596 = vsel %vm2341, %v2568, %v2592
  %v2597 = vmul.f32 %v2593, %v2470
  %v2598 = vmul.f32 %v2594, %v2471
  %v2599 = vmul.f32 %v2595, %v2472
  %v2600 = vmul.f32 %v2596, %v2473
  %2605 = vrot.lane.b32.xlu0 %v2593, 64
  %v2606 = vpop.permute.xlu0 %2605
  %2607 = vrot.lane.b32.xlu0 %v2594, 64
  %v2608 = vpop.permute.xlu0 %2607
  %2609 = vrot.lane.b32.xlu0 %v2595, 64
  %v2610 = vpop.permute.xlu0 %2609
  %2611 = vrot.lane.b32.xlu0 %v2596, 64
  %v2612 = vpop.permute.xlu0 %2611
  %v2617 = vmul.f32 %v2593, %v2606
  %v2618 = vmul.f32 %v2594, %v2608
  %v2619 = vmul.f32 %v2595, %v2610
  %v2620 = vmul.f32 %v2596, %v2612
  %2625 = vrot.lane.b32.xlu0 %v2617, 32
  %v2626 = vpop.permute.xlu0 %2625
  %2627 = vrot.lane.b32.xlu0 %v2618, 32
  %v2628 = vpop.permute.xlu0 %2627
  %2629 = vrot.lane.b32.xlu0 %v2619, 32
  %v2630 = vpop.permute.xlu0 %2629
  %2631 = vrot.lane.b32.xlu0 %v2620, 32
  %v2632 = vpop.permute.xlu0 %2631
  %v2637 = vadd.f32 %v2597, %v2626
  %v2638 = vadd.f32 %v2598, %v2628
  %v2639 = vadd.f32 %v2599, %v2630
  %v2640 = vadd.f32 %v2600, %v2632
  %v2641 = vtanh.pop %v2637
  %v2642 = vtanh.pop %v2638
  %v2643 = vtanh.pop %v2639
  %v2644 = vtanh.pop %v2640
  %2649 = vrot.lane.b32.xlu0 %v2641, 64
  %v2650 = vpop.permute.xlu0 %2649
  %2651 = vrot.lane.b32.xlu0 %v2642, 64
  %v2652 = vpop.permute.xlu0 %2651
  %2653 = vrot.lane.b32.xlu0 %v2643, 64
  %v2654 = vpop.permute.xlu0 %2653
  %2655 = vrot.lane.b32.xlu0 %v2644, 64
  %v2656 = vpop.permute.xlu0 %2655
  %v2661 = vmul.f32 %v2593, %v2650
  %v2662 = vmul.f32 %v2594, %v2652
  %v2663 = vmul.f32 %v2595, %v2654
  %v2664 = vmul.f32 %v2596, %v2656
  %v2665 = vpack.c.bf16 %v2662, %v2661
  %v2666 = vpack.c.bf16 %v2664, %v2663
  %2669 = vrot.lane.b32.xlu0 %v2665, 32
  %v2670 = vpop.permute.xlu0 %2669
  %2671 = vrot.lane.b32.xlu0 %v2666, 32
  %v2672 = vpop.permute.xlu0 %2671
  %v2674 = vsel %vm262, %v2670, 0
  %v2677 = vsel %vm262, %v2672, 0
  %2679 = vmatprep.subr.bf16.mxu0 0
  %2680 = vmatpush1.bf16.msra.mxu0 %v2335
  %2681 = vmatprep.subr.bf16.mxu0 0
  %2682 = vmatpush1.bf16.msra.mxu0 %v2336
  %2683 = vmatprep.subr.bf16.mxu0 0
  %2684 = vmatpush1.bf16.msra.mxu0 0
  %2685 = vmatprep.subr.bf16.mxu0 0
  %2686 = vmatpush1.bf16.msra.mxu0 0
  %2687 = vmatprep.subr.bf16.mxu0 0
  %2688 = vmatpush1.bf16.msra.mxu0 0
  %2689 = vmatprep.subr.bf16.mxu0 0
  %2690 = vmatpush1.bf16.msra.mxu0 0
  %2691 = vmatprep.subr.bf16.mxu0 0
  %2692 = vmatpush1.bf16.msra.mxu0 0
  %2693 = vmatprep.subr.bf16.mxu0 0
  %2694 = vmatpush1.bf16.msra.mxu0 0
  %2695 = vmatprep.subr.bf16.mxu0 0
  %2696 = vmatpush1.bf16.msra.mxu0 0
  %2697 = vmatprep.subr.bf16.mxu0 0
  %2698 = vmatpush1.bf16.msra.mxu0 0
  %2699 = vmatprep.subr.bf16.mxu0 0
  %2700 = vmatpush1.bf16.msra.mxu0 0
  %2701 = vmatprep.subr.bf16.mxu0 0
  %2702 = vmatpush1.bf16.msra.mxu0 0
  %2703 = vmatprep.subr.bf16.mxu0 0
  %2704 = vmatpush1.bf16.msra.mxu0 0
  %2705 = vmatprep.subr.bf16.mxu0 0
  %2706 = vmatpush1.bf16.msra.mxu0 0
  %2707 = vmatprep.subr.bf16.mxu0 0
  %2708 = vmatpush1.bf16.msra.mxu0 0
  %2709 = vmatprep.subr.bf16.mxu0 0
  %2710 = vmatpush1.bf16.msra.mxu0 0
  %2711 = vmatprep.mubr.bf16.mxu0 0
  %2712 = vmatmul.mubr.bf16.gmra.mrb[0].mxu0 %v2674
  %v2713 = vpop.f32.mrb[0].mxu0
  %v2714 = vadd.f32 0.0, %v2713
  %v2715 = vpop.f32.mrb[0].mxu0
  %v2716 = vpop.f32.mrb[0].mxu0
  %v2717 = vadd.f32 0.0, %v2716
  %v2718 = vpop.f32.mrb[0].mxu0
  %2719 = vmatprep.mubr.bf16.mxu0 0
  %2720 = vmatmul.mubr.bf16.gmra.mrb[0].mxu0 %v2677
  %v2721 = vpop.f32.mrb[0].mxu0
  %v2722 = vadd.f32 0.0, %v2721
  %v2723 = vpop.f32.mrb[0].mxu0
  %v2724 = vpop.f32.mrb[0].mxu0
  %v2725 = vadd.f32 0.0, %v2724
  %v2726 = vpop.f32.mrb[0].mxu0
  %2727 = vdwg.mxu0
  %v2728 = vadd.f32 %v2285, %v2714
  %v2729 = vadd.f32 %v2288, %v2717
  %v2730 = vadd.f32 %v2293, %v2722
  %v2731 = vadd.f32 %v2296, %v2725
  %v2732 = vtanh.pop %v2728
  %v2733 = vtanh.pop %v2729
  %v2734 = vtanh.pop %v2730
  %v2735 = vtanh.pop %v2731
  %v2736 = vxor.u32 %v2728, 2147483648
  %v2737 = vxor.u32 %v2729, 2147483648
  %v2738 = vxor.u32 %v2730, 2147483648
  %v2739 = vxor.u32 %v2731, 2147483648
  %v2740 = vmul.f32 %v2736, 1.442695
  %v2741 = vpow.pop %v2740
  %v2742 = vmul.f32 %v2737, 1.442695
  %v2743 = vpow.pop %v2742
  %v2744 = vmul.f32 %v2738, 1.442695
  %v2745 = vpow.pop %v2744
  %v2746 = vmul.f32 %v2739, 1.442695
  %v2747 = vpow.pop %v2746
  %v2748 = vadd.f32 %v2741, 1.0
  %v2749 = vadd.f32 %v2743, 1.0
  %v2750 = vadd.f32 %v2745, 1.0
  %v2751 = vadd.f32 %v2747, 1.0
  %v2752 = vrcp.pop %v2748
  %v2753 = vmul.f32 1.0, %v2752
  %v2754 = vrcp.pop %v2749
  %v2755 = vmul.f32 1.0, %v2754
  %v2756 = vrcp.pop %v2750
  %v2757 = vmul.f32 1.0, %v2756
  %v2758 = vrcp.pop %v2751
  %v2759 = vmul.f32 1.0, %v2758
  %v2760 = vsel %vm2341, %v2732, %v2753
  %v2761 = vsel %vm2341, %v2733, %v2755
  %v2762 = vsel %vm2341, %v2734, %v2757
  %v2763 = vsel %vm2341, %v2735, %v2759
  %v2764 = vmul.f32 %v2760, %v2637
  %v2765 = vmul.f32 %v2761, %v2638
  %v2766 = vmul.f32 %v2762, %v2639
  %v2767 = vmul.f32 %v2763, %v2640
  %2772 = vrot.lane.b32.xlu0 %v2760, 64
  %v2773 = vpop.permute.xlu0 %2772
  %2774 = vrot.lane.b32.xlu0 %v2761, 64
  %v2775 = vpop.permute.xlu0 %2774
  %2776 = vrot.lane.b32.xlu0 %v2762, 64
  %v2777 = vpop.permute.xlu0 %2776
  %2778 = vrot.lane.b32.xlu0 %v2763, 64
  %v2779 = vpop.permute.xlu0 %2778
  %v2784 = vmul.f32 %v2760, %v2773
  %v2785 = vmul.f32 %v2761, %v2775
  %v2786 = vmul.f32 %v2762, %v2777
  %v2787 = vmul.f32 %v2763, %v2779
  %2792 = vrot.lane.b32.xlu0 %v2784, 32
  %v2793 = vpop.permute.xlu0 %2792
  %2794 = vrot.lane.b32.xlu0 %v2785, 32
  %v2795 = vpop.permute.xlu0 %2794
  %2796 = vrot.lane.b32.xlu0 %v2786, 32
  %v2797 = vpop.permute.xlu0 %2796
  %2798 = vrot.lane.b32.xlu0 %v2787, 32
  %v2799 = vpop.permute.xlu0 %2798
  %v2804 = vadd.f32 %v2764, %v2793
  %v2805 = vadd.f32 %v2765, %v2795
  %v2806 = vadd.f32 %v2766, %v2797
  %v2807 = vadd.f32 %v2767, %v2799
  %v2808 = vtanh.pop %v2804
  %v2809 = vtanh.pop %v2805
  %v2810 = vtanh.pop %v2806
  %v2811 = vtanh.pop %v2807
  %2816 = vrot.lane.b32.xlu0 %v2808, 64
  %v2817 = vpop.permute.xlu0 %2816
  %2818 = vrot.lane.b32.xlu0 %v2809, 64
  %v2819 = vpop.permute.xlu0 %2818
  %2820 = vrot.lane.b32.xlu0 %v2810, 64
  %v2821 = vpop.permute.xlu0 %2820
  %2822 = vrot.lane.b32.xlu0 %v2811, 64
  %v2823 = vpop.permute.xlu0 %2822
  %v2828 = vmul.f32 %v2760, %v2817
  %v2829 = vmul.f32 %v2761, %v2819
  %v2830 = vmul.f32 %v2762, %v2821
  %v2831 = vmul.f32 %v2763, %v2823
  %v2832 = vpack.c.bf16 %v2829, %v2828
  %v2833 = vpack.c.bf16 %v2831, %v2830
  %2836 = vrot.lane.b32.xlu0 %v2832, 32
  %v2837 = vpop.permute.xlu0 %2836
  %2838 = vrot.lane.b32.xlu0 %v2833, 32
  %v2839 = vpop.permute.xlu0 %2838
  %v2841 = vsel %vm262, %v2837, 0
  %v2844 = vsel %vm262, %v2839, 0
  %2846 = vmatprep.subr.bf16.mxu0 0
  %2847 = vmatpush1.bf16.msra.mxu0 %v2335
  %2848 = vmatprep.subr.bf16.mxu0 0
  %2849 = vmatpush1.bf16.msra.mxu0 %v2336
  %2850 = vmatprep.subr.bf16.mxu0 0
  %2851 = vmatpush1.bf16.msra.mxu0 0
  %2852 = vmatprep.subr.bf16.mxu0 0
  %2853 = vmatpush1.bf16.msra.mxu0 0
  %2854 = vmatprep.subr.bf16.mxu0 0
  %2855 = vmatpush1.bf16.msra.mxu0 0
  %2856 = vmatprep.subr.bf16.mxu0 0
  %2857 = vmatpush1.bf16.msra.mxu0 0
  %2858 = vmatprep.subr.bf16.mxu0 0
  %2859 = vmatpush1.bf16.msra.mxu0 0
  %2860 = vmatprep.subr.bf16.mxu0 0
  %2861 = vmatpush1.bf16.msra.mxu0 0
  %2862 = vmatprep.subr.bf16.mxu0 0
  %2863 = vmatpush1.bf16.msra.mxu0 0
  %2864 = vmatprep.subr.bf16.mxu0 0
  %2865 = vmatpush1.bf16.msra.mxu0 0
  %2866 = vmatprep.subr.bf16.mxu0 0
  %2867 = vmatpush1.bf16.msra.mxu0 0
  %2868 = vmatprep.subr.bf16.mxu0 0
  %2869 = vmatpush1.bf16.msra.mxu0 0
  %2870 = vmatprep.subr.bf16.mxu0 0
  %2871 = vmatpush1.bf16.msra.mxu0 0
  %2872 = vmatprep.subr.bf16.mxu0 0
  %2873 = vmatpush1.bf16.msra.mxu0 0
  %2874 = vmatprep.subr.bf16.mxu0 0
  %2875 = vmatpush1.bf16.msra.mxu0 0
  %2876 = vmatprep.subr.bf16.mxu0 0
  %2877 = vmatpush1.bf16.msra.mxu0 0
  %2878 = vmatprep.mubr.bf16.mxu0 0
  %2879 = vmatmul.mubr.bf16.gmra.mrb[0].mxu0 %v2841
  %v2880 = vpop.f32.mrb[0].mxu0
  %v2881 = vadd.f32 0.0, %v2880
  %v2882 = vpop.f32.mrb[0].mxu0
  %v2883 = vpop.f32.mrb[0].mxu0
  %v2884 = vadd.f32 0.0, %v2883
  %v2885 = vpop.f32.mrb[0].mxu0
  %2886 = vmatprep.mubr.bf16.mxu0 0
  %2887 = vmatmul.mubr.bf16.gmra.mrb[0].mxu0 %v2844
  %v2888 = vpop.f32.mrb[0].mxu0
  %v2889 = vadd.f32 0.0, %v2888
  %v2890 = vpop.f32.mrb[0].mxu0
  %v2891 = vpop.f32.mrb[0].mxu0
  %v2892 = vadd.f32 0.0, %v2891
  %v2893 = vpop.f32.mrb[0].mxu0
  %2894 = vdwg.mxu0
  %v2895 = vadd.f32 %v2301, %v2881
  %v2896 = vadd.f32 %v2304, %v2884
  %v2897 = vadd.f32 %v2309, %v2889
  %v2898 = vadd.f32 %v2312, %v2892
  %v2899 = vtanh.pop %v2895
  %v2900 = vtanh.pop %v2896
  %v2901 = vtanh.pop %v2897
  %v2902 = vtanh.pop %v2898
  %v2903 = vxor.u32 %v2895, 2147483648
  %v2904 = vxor.u32 %v2896, 2147483648
  %v2905 = vxor.u32 %v2897, 2147483648
  %v2906 = vxor.u32 %v2898, 2147483648
  %v2907 = vmul.f32 %v2903, 1.442695
  %v2908 = vpow.pop %v2907
  %v2909 = vmul.f32 %v2904, 1.442695
  %v2910 = vpow.pop %v2909
  %v2911 = vmul.f32 %v2905, 1.442695
  %v2912 = vpow.pop %v2911
  %v2913 = vmul.f32 %v2906, 1.442695
  %v2914 = vpow.pop %v2913
  %v2915 = vadd.f32 %v2908, 1.0
  %v2916 = vadd.f32 %v2910, 1.0
  %v2917 = vadd.f32 %v2912, 1.0
  %v2918 = vadd.f32 %v2914, 1.0
  %v2919 = vrcp.pop %v2915
  %v2920 = vmul.f32 1.0, %v2919
  %v2921 = vrcp.pop %v2916
  %v2922 = vmul.f32 1.0, %v2921
  %v2923 = vrcp.pop %v2917
  %v2924 = vmul.f32 1.0, %v2923
  %v2925 = vrcp.pop %v2918
  %v2926 = vmul.f32 1.0, %v2925
  %v2927 = vsel %vm2341, %v2899, %v2920
  %v2928 = vsel %vm2341, %v2900, %v2922
  %v2929 = vsel %vm2341, %v2901, %v2924
  %v2930 = vsel %vm2341, %v2902, %v2926
  %v2931 = vmul.f32 %v2927, %v2804
  %v2932 = vmul.f32 %v2928, %v2805
  %v2933 = vmul.f32 %v2929, %v2806
  %v2934 = vmul.f32 %v2930, %v2807
  %2939 = vrot.lane.b32.xlu0 %v2927, 64
  %v2940 = vpop.permute.xlu0 %2939
  %2941 = vrot.lane.b32.xlu0 %v2928, 64
  %v2942 = vpop.permute.xlu0 %2941
  %2943 = vrot.lane.b32.xlu0 %v2929, 64
  %v2944 = vpop.permute.xlu0 %2943
  %2945 = vrot.lane.b32.xlu0 %v2930, 64
  %v2946 = vpop.permute.xlu0 %2945
  %v2951 = vmul.f32 %v2927, %v2940
  %v2952 = vmul.f32 %v2928, %v2942
  %v2953 = vmul.f32 %v2929, %v2944
  %v2954 = vmul.f32 %v2930, %v2946
  %2959 = vrot.lane.b32.xlu0 %v2951, 32
  %v2960 = vpop.permute.xlu0 %2959
  %2961 = vrot.lane.b32.xlu0 %v2952, 32
  %v2962 = vpop.permute.xlu0 %2961
  %2963 = vrot.lane.b32.xlu0 %v2953, 32
  %v2964 = vpop.permute.xlu0 %2963
  %2965 = vrot.lane.b32.xlu0 %v2954, 32
  %v2966 = vpop.permute.xlu0 %2965
  %v2971 = vadd.f32 %v2931, %v2960
  %v2972 = vadd.f32 %v2932, %v2962
  %v2973 = vadd.f32 %v2933, %v2964
  %v2974 = vadd.f32 %v2934, %v2966
  %v2975 = vtanh.pop %v2971
  %v2976 = vtanh.pop %v2972
  %v2977 = vtanh.pop %v2973
  %v2978 = vtanh.pop %v2974
  %2983 = vrot.lane.b32.xlu0 %v2975, 64
  %v2984 = vpop.permute.xlu0 %2983
  %2985 = vrot.lane.b32.xlu0 %v2976, 64
  %v2986 = vpop.permute.xlu0 %2985
  %2987 = vrot.lane.b32.xlu0 %v2977, 64
  %v2988 = vpop.permute.xlu0 %2987
  %2989 = vrot.lane.b32.xlu0 %v2978, 64
  %v2990 = vpop.permute.xlu0 %2989
  %v2995 = vmul.f32 %v2927, %v2984
  %v2996 = vmul.f32 %v2928, %v2986
  %v2997 = vmul.f32 %v2929, %v2988
  %v2998 = vmul.f32 %v2930, %v2990
  %v2999 = vpack.c.bf16 %v2996, %v2995
  %v3000 = vpack.c.bf16 %v2998, %v2997
  %3003 = vrot.lane.b32.xlu0 %v2999, 32
  %v3004 = vpop.permute.xlu0 %3003
  %3005 = vrot.lane.b32.xlu0 %v3000, 32
  %v3006 = vpop.permute.xlu0 %3005
  %v3008 = vsel %vm262, %v3004, 0
  %v3011 = vsel %vm262, %v3006, 0
  %3013 = vmatprep.subr.bf16.mxu0 0
  %3014 = vmatpush1.bf16.msra.mxu0 %v2335
  %3015 = vmatprep.subr.bf16.mxu0 0
  %3016 = vmatpush1.bf16.msra.mxu0 %v2336
  %3017 = vmatprep.subr.bf16.mxu0 0
  %3018 = vmatpush1.bf16.msra.mxu0 0
  %3019 = vmatprep.subr.bf16.mxu0 0
  %3020 = vmatpush1.bf16.msra.mxu0 0
  %3021 = vmatprep.subr.bf16.mxu0 0
  %3022 = vmatpush1.bf16.msra.mxu0 0
  %3023 = vmatprep.subr.bf16.mxu0 0
  %3024 = vmatpush1.bf16.msra.mxu0 0
  %3025 = vmatprep.subr.bf16.mxu0 0
  %3026 = vmatpush1.bf16.msra.mxu0 0
  %3027 = vmatprep.subr.bf16.mxu0 0
  %3028 = vmatpush1.bf16.msra.mxu0 0
  %3029 = vmatprep.subr.bf16.mxu0 0
  %3030 = vmatpush1.bf16.msra.mxu0 0
  %3031 = vmatprep.subr.bf16.mxu0 0
  %3032 = vmatpush1.bf16.msra.mxu0 0
  %3033 = vmatprep.subr.bf16.mxu0 0
  %3034 = vmatpush1.bf16.msra.mxu0 0
  %3035 = vmatprep.subr.bf16.mxu0 0
  %3036 = vmatpush1.bf16.msra.mxu0 0
  %3037 = vmatprep.subr.bf16.mxu0 0
  %3038 = vmatpush1.bf16.msra.mxu0 0
  %3039 = vmatprep.subr.bf16.mxu0 0
  %3040 = vmatpush1.bf16.msra.mxu0 0
  %3041 = vmatprep.subr.bf16.mxu0 0
  %3042 = vmatpush1.bf16.msra.mxu0 0
  %3043 = vmatprep.subr.bf16.mxu0 0
  %3044 = vmatpush1.bf16.msra.mxu0 0
  %3045 = vmatprep.mubr.bf16.mxu0 0
  %3046 = vmatmul.mubr.bf16.gmra.mrb[0].mxu0 %v3008
  %v3047 = vpop.f32.mrb[0].mxu0
  %v3048 = vadd.f32 0.0, %v3047
  %v3049 = vpop.f32.mrb[0].mxu0
  %v3050 = vpop.f32.mrb[0].mxu0
  %v3051 = vadd.f32 0.0, %v3050
  %v3052 = vpop.f32.mrb[0].mxu0
  %3053 = vmatprep.mubr.bf16.mxu0 0
  %3054 = vmatmul.mubr.bf16.gmra.mrb[0].mxu0 %v3011
  %v3055 = vpop.f32.mrb[0].mxu0
  %v3056 = vadd.f32 0.0, %v3055
  %v3057 = vpop.f32.mrb[0].mxu0
  %v3058 = vpop.f32.mrb[0].mxu0
  %v3059 = vadd.f32 0.0, %v3058
  %v3060 = vpop.f32.mrb[0].mxu0
  %3061 = vdwg.mxu0
  %v3062 = vadd.f32 %v2317, %v3048
  %v3063 = vadd.f32 %v2320, %v3051
  %v3064 = vadd.f32 %v2325, %v3056
  %v3065 = vadd.f32 %v2328, %v3059
  %v3066 = vtanh.pop %v3062
  %v3067 = vtanh.pop %v3063
  %v3068 = vtanh.pop %v3064
  %v3069 = vtanh.pop %v3065
  %v3070 = vxor.u32 %v3062, 2147483648
  %v3071 = vxor.u32 %v3063, 2147483648
  %v3072 = vxor.u32 %v3064, 2147483648
  %v3073 = vxor.u32 %v3065, 2147483648
  %v3074 = vmul.f32 %v3070, 1.442695
  %v3075 = vpow.pop %v3074
  %v3076 = vmul.f32 %v3071, 1.442695
  %v3077 = vpow.pop %v3076
  %v3078 = vmul.f32 %v3072, 1.442695
  %v3079 = vpow.pop %v3078
  %v3080 = vmul.f32 %v3073, 1.442695
  %v3081 = vpow.pop %v3080
  %v3082 = vadd.f32 %v3075, 1.0
  %v3083 = vadd.f32 %v3077, 1.0
  %v3084 = vadd.f32 %v3079, 1.0
  %v3085 = vadd.f32 %v3081, 1.0
  %v3086 = vrcp.pop %v3082
  %v3087 = vmul.f32 1.0, %v3086
  %v3088 = vrcp.pop %v3083
  %v3089 = vmul.f32 1.0, %v3088
  %v3090 = vrcp.pop %v3084
  %v3091 = vmul.f32 1.0, %v3090
  %v3092 = vrcp.pop %v3085
  %v3093 = vmul.f32 1.0, %v3092
  %v3094 = vsel %vm2341, %v3066, %v3087
  %v3095 = vsel %vm2341, %v3067, %v3089
  %v3096 = vsel %vm2341, %v3068, %v3091
  %v3097 = vsel %vm2341, %v3069, %v3093
  %v3098 = vmul.f32 %v3094, %v2971
  %v3099 = vmul.f32 %v3095, %v2972
  %v3100 = vmul.f32 %v3096, %v2973
  %v3101 = vmul.f32 %v3097, %v2974
  %3106 = vrot.lane.b32.xlu0 %v3094, 64
  %v3107 = vpop.permute.xlu0 %3106
  %3108 = vrot.lane.b32.xlu0 %v3095, 64
  %v3109 = vpop.permute.xlu0 %3108
  %3110 = vrot.lane.b32.xlu0 %v3096, 64
  %v3111 = vpop.permute.xlu0 %3110
  %3112 = vrot.lane.b32.xlu0 %v3097, 64
  %v3113 = vpop.permute.xlu0 %3112
  %v3118 = vmul.f32 %v3094, %v3107
  %v3119 = vmul.f32 %v3095, %v3109
  %v3120 = vmul.f32 %v3096, %v3111
  %v3121 = vmul.f32 %v3097, %v3113
  %3126 = vrot.lane.b32.xlu0 %v3118, 32
  %v3127 = vpop.permute.xlu0 %3126
  %3128 = vrot.lane.b32.xlu0 %v3119, 32
  %v3129 = vpop.permute.xlu0 %3128
  %3130 = vrot.lane.b32.xlu0 %v3120, 32
  %v3131 = vpop.permute.xlu0 %3130
  %3132 = vrot.lane.b32.xlu0 %v3121, 32
  %v3133 = vpop.permute.xlu0 %3132
  %v3138 = vadd.f32 %v3098, %v3127
  %v3139 = vadd.f32 %v3099, %v3129
  %v3140 = vadd.f32 %v3100, %v3131
  %v3141 = vadd.f32 %v3101, %v3133
  %v3142 = vtanh.pop %v3138
  %v3143 = vtanh.pop %v3139
  %v3144 = vtanh.pop %v3140
  %v3145 = vtanh.pop %v3141
  %3150 = vrot.lane.b32.xlu0 %v3142, 64
  %v3151 = vpop.permute.xlu0 %3150
  %3152 = vrot.lane.b32.xlu0 %v3143, 64
  %v3153 = vpop.permute.xlu0 %3152
  %3154 = vrot.lane.b32.xlu0 %v3144, 64
  %v3155 = vpop.permute.xlu0 %3154
  %3156 = vrot.lane.b32.xlu0 %v3145, 64
  %v3157 = vpop.permute.xlu0 %3156
  %v3162 = vmul.f32 %v3094, %v3151
  %v3163 = vmul.f32 %v3095, %v3153
  %v3164 = vmul.f32 %v3096, %v3155
  %v3165 = vmul.f32 %v3097, %v3157
  %v3166 = vld [vmem:[%s10] sm:$0x1]
  %v3168 = vlaneseq
  %v3169 = vshrl.u32 %v3168, 7
  %v3170 = vsub.s32 0, %v3169
  %v3171 = vrot.slane %v3166, %v3170
  %3172 = vrot.lane.b32.xlu0 %v3171, 96
  %v3173 = vpop.permute.xlu0 %3172
  %v3175 = vmul.f32 %v3162, %v3173
  %v3176 = vmul.f32 %v3163, %v3173
  %v3177 = vmul.f32 %v3164, %v3173
  %v3178 = vmul.f32 %v3165, %v3173
  %3183 = vrot.lane.b32.xlu0 %v3175, 32
  %v3184 = vpop.permute.xlu0 %3183
  %3185 = vrot.lane.b32.xlu0 %v3176, 32
  %v3186 = vpop.permute.xlu0 %3185
  %3187 = vrot.lane.b32.xlu0 %v3177, 32
  %v3188 = vpop.permute.xlu0 %3187
  %3189 = vrot.lane.b32.xlu0 %v3178, 32
  %v3190 = vpop.permute.xlu0 %3189
  %v3195 = vsel %vm262, %v3184, 0.0
  %3196 = vadd.xlane.f32.xlu0 %v3195
  %v3197 = vpop.xlane.xlu0 %3196
  %v3198 = vsel %vm262, %v3186, 0.0
  %3199 = vadd.xlane.f32.xlu0 %v3198
  %v3200 = vpop.xlane.xlu0 %3199
  %v3201 = vsel %vm262, %v3188, 0.0
  %3202 = vadd.xlane.f32.xlu0 %v3201
  %v3203 = vpop.xlane.xlu0 %3202
  %v3204 = vsel %vm262, %v3190, 0.0
  %3205 = vadd.xlane.f32.xlu0 %v3204
  %v3206 = vpop.xlane.xlu0 %3205
  %s3207 = sld [smem:[#allocation2]]
  %v3208 = vstv %s3207
  %v3209 = vadd.f32 %v3197, %v3208
  %v3210 = vadd.f32 %v3200, %v3208
  %v3211 = vadd.f32 %v3203, %v3208
  %v3212 = vadd.f32 %v3206, %v3208
  %vm3213 = vcmask 7168
  %3214 = vst.msk [vmem:[%s12] sm:$0xff] %vm3213, %v3209
  %3215 = vst.msk [vmem:[%s12 + $0x8] sm:$0xff] %vm3213, %v3210
  %3216 = vst.msk [vmem:[%s12 + $0x10] sm:$0xff] %vm3213, %v3211
  %3217 = vst.msk [vmem:[%s12 + $0x18] sm:$0xff] %vm3213, %v3212
  // Predicated region
  $region50: #{tpu_custom_call.1} parent=0 // pred_check
    _
  $region51: #{tpu_custom_call.1} parent=0 // pred_check_branch
    %3219 = sbr.rel (0) target = $region53
  $region52: #{tpu_custom_call.1} parent=0 // pred_region
    _
  $region53: #{tpu_custom_call.1} parent=0 // pred_fallthru
    _
  // Predicated region
  $region54: #{tpu_custom_call.1} parent=0 // pred_check
    _
  $region55: #{tpu_custom_call.1} parent=0 // pred_check_branch
    %3221 = sbr.rel (0) target = $region57
  $region56: #{tpu_custom_call.1} parent=0 // pred_region
    _
  $region57: #{tpu_custom_call.1} parent=0 // pred_fallthru
    _

</llo_original>
